<compile_context>
chip_gen: v6e
topology: v6e:2x2x1
jax: 0.10.0
libtpu: 0.0.40
codegen_flags: <defaults>
</compile_context>

<pallas_src>
import math
import jax
import jax.numpy as jnp
from jax.experimental import pallas as pl
from jax.experimental.pallas import tpu as pltpu

SELU_ALPHA = 1.6732632423543772848170429916717
SELU_SCALE = 1.0507009873554804934193349852946
LANE = 128
SUBLANE = 8


def _round_up(n, m):
    return ((n + m - 1) // m) * m


def _cdiv(a, b):
    return -(-a // b)


def _selu(x):
    dt = x.dtype
    one = jnp.asarray(1.0, dt)
    alpha = jnp.asarray(SELU_ALPHA, dt)
    scale = jnp.asarray(SELU_SCALE, dt)
    return scale * jnp.where(x > 0, x, alpha * (jnp.exp(x) - one))


def _elementwise_dtype():
    """bf16 elementwise chain on v6e/v7x (bf16 VALU/EUP); f32 on v5e/older."""
    try:
        kind = jax.devices()[0].device_kind.lower()
    except Exception:
        kind = ""
    if ("v6" in kind) or ("v7" in kind) or ("tpu7" in kind):
        return jnp.bfloat16
    return jnp.float32


def _vmem_budget_bytes():
    """Per-generation usable VMEM (leave headroom for the compiler)."""
    try:
        cap = int(pltpu.get_tpu_info().vmem_capacity_bytes)
    except Exception:
        cap = 64 * 1024 * 1024
    return max(16 * 1024 * 1024, cap - 16 * 1024 * 1024)


def _make_kernel(num_layers, stream_layers, ew_dtype):
    inv_l = 1.0 / float(num_layers)

    def kernel(x_ref, w_in_ref, b_in_ref, w_l_ref, b_l_ref, w_out_ref, b_out_ref,
               out_ref, xfinal_ref, h_sc, res_sc, zt_sc):
        l = pl.program_id(1)

        # ----- layer 0: input Linear + SELU, init carried state -----
        @pl.when(l == 0)
        def _():
            h0 = jnp.dot(x_ref[...], w_in_ref[...],
                         preferred_element_type=jnp.float32) + b_in_ref[...]
            h0 = _selu(h0.astype(ew_dtype)).astype(jnp.float32)
            h_sc[...] = h0
            res_sc[...] = jnp.zeros_like(h0)
            zt_sc[...] = jnp.zeros_like(h0)

        # ----- one WaveNetLayer step (weights streamed or resident) -----
        if stream_layers:
            w_i = w_l_ref[0]          # block (1, HP, HP) -> (HP, HP)
            b_i = b_l_ref[0]          # block (1, 1, HP)  -> (1, HP)
        else:
            w_i = w_l_ref[l]          # resident stack, dynamic leading index
            b_i = b_l_ref[l]

        a = (h_sc[...] + res_sc[...]).astype(jnp.bfloat16)
        h = jnp.dot(a, w_i, preferred_element_type=jnp.float32) + b_i
        z = _selu(h.astype(ew_dtype))
        res = (jnp.asarray(0.8, ew_dtype) * res_sc[...].astype(ew_dtype)
               + jnp.asarray(0.2, ew_dtype) * z)
        zt = zt_sc[...] + z.astype(jnp.float32)          # z_total stays f32
        h_new = jnp.tanh((zt * inv_l).astype(ew_dtype))

        h_sc[...] = h_new.astype(jnp.float32)
        res_sc[...] = res.astype(jnp.float32)
        zt_sc[...] = zt

        # ----- last layer: output Linear, write both outputs -----
        @pl.when(l == pl.num_programs(1) - 1)
        def _():
            xfinal_ref[...] = h_new.astype(xfinal_ref.dtype)
            out_ref[...] = (jnp.dot(h_new.astype(jnp.bfloat16), w_out_ref[...],
                                    preferred_element_type=jnp.float32)
                            + b_out_ref[...]).astype(out_ref.dtype)

    return kernel


def neural_network_forward(x, packed, *, block_batch=256, force_stream=None,
                           elementwise_dtype=None):
    """Runs the full NeuralNetwork forward in one Pallas call.

    `packed` holds lane-padded params (see pack_params).  Returns
    (logits [B, output_size], final_hidden [B, hidden_size]), matching the
    PyTorch module's (output_layer(X, ...), X) tuple.
    """
    B, IN = x.shape
    INP, HP = packed["w_in"].shape
    OP = packed["w_out"].shape[1]
    L = packed["w_layers"].shape[0]
    H = packed["hidden_size"]
    O = packed["output_size"]
    assert IN == packed["input_size"]

    ew_dtype = elementwise_dtype or _elementwise_dtype()
    budget = _vmem_budget_bytes()

    # ---- batch tiling: minimize padding; >= 2 tiles when B > 8 (v7x 2 TCs) ----
    def tb_for(n):
        return _round_up(_cdiv(B, n), SUBLANE)

    min_tiles = 2 if B > SUBLANE else 1
    n_tiles = max(min_tiles, _cdiv(B, block_batch))
    TB = tb_for(n_tiles)
    while TB > block_batch:
        n_tiles += 1
        TB = tb_for(n_tiles)

    def vmem_estimate(tb, stream, single_buf):
        wbuf = 1 if single_buf else 2
        fixed = (INP * HP * 2 + HP * 4 + HP * OP * 2 + OP * 4) * wbuf
        layers = ((HP * HP * 2 + HP * 4) * 2 if stream
                  else (L * HP * HP * 2 + L * HP * 4) * wbuf)
        io = tb * INP * 2 * 2 + (tb * OP * 4 + tb * HP * 4) * 2
        scratch = 3 * tb * HP * 4
        live = 8 * tb * HP * 4           # elementwise temporaries headroom
        return fixed + layers + io + scratch + live

    # ---- stream layers only if the resident [L, HP, HP] stack would not fit ----
    if force_stream is None:
        stream = vmem_estimate(TB, False, True) > budget
    else:
        stream = bool(force_stream)

    while vmem_estimate(TB, stream, True) > budget and TB > SUBLANE:
        n_tiles += 1
        TB = tb_for(n_tiles)

    Bp = n_tiles * TB
    xp = jnp.pad(x, ((0, Bp - B), (0, INP - IN))).astype(jnp.bfloat16)

    grid = (n_tiles, L)
    kernel = _make_kernel(L, stream, ew_dtype)

    def build_specs(single_buf):
        wmode = dict(pipeline_mode=pl.Buffered(1)) if single_buf else {}
        const2 = lambda i, l: (0, 0)
        const3 = lambda i, l: (0, 0, 0)
        if stream:
            wl_spec = pl.BlockSpec((1, HP, HP), lambda i, l: (l, 0, 0))
            bl_spec = pl.BlockSpec((1, 1, HP), lambda i, l: (l, 0, 0))
        else:
            wl_spec = pl.BlockSpec((L, HP, HP), const3, **wmode)
            bl_spec = pl.BlockSpec((L, 1, HP), const3, **wmode)
        in_specs = [
            pl.BlockSpec((TB, INP), lambda i, l: (i, 0)),   # x (bf16, batch tiled)
            pl.BlockSpec((INP, HP), const2, **wmode),       # w_in  (resident)
            pl.BlockSpec((1, HP), const2, **wmode),         # b_in  (resident)
            wl_spec,                                        # w_layers
            bl_spec,                                        # b_layers
            pl.BlockSpec((HP, OP), const2, **wmode),        # w_out (resident)
            pl.BlockSpec((1, OP), const2, **wmode),         # b_out (resident)
        ]
        out_specs = (
            pl.BlockSpec((TB, OP), lambda i, l: (i, 0)),    # logits (lane-dense)
            pl.BlockSpec((TB, HP), lambda i, l: (i, 0)),    # final hidden
        )
        return in_specs, out_specs

    flops = 2 * Bp * (INP * HP + L * HP * HP + HP * OP)
    transc = Bp * HP * (2 * L + 1)
    w_bytes = ((INP * HP + HP * OP) * 2 + (HP + L * HP + OP) * 4
               + L * HP * HP * 2 * (n_tiles if stream else 1))
    io_bytes = Bp * INP * 2 + Bp * (OP + HP) * 4
    cost = pl.CostEstimate(flops=int(flops), transcendentals=int(transc),
                           bytes_accessed=int(w_bytes + io_bytes))

    def run(single_buf):
        in_specs, out_specs = build_specs(single_buf)
        vmem_limit = int(min(budget,
                             max(2 * vmem_estimate(TB, stream, single_buf),
                                 32 * 1024 * 1024)))
        return pl.pallas_call(
            kernel,
            grid=grid,
            out_shape=(jax.ShapeDtypeStruct((Bp, OP), jnp.float32),
                       jax.ShapeDtypeStruct((Bp, HP), jnp.float32)),
            in_specs=in_specs,
            out_specs=out_specs,
            scratch_shapes=[pltpu.VMEM((TB, HP), jnp.float32),   # h
                            pltpu.VMEM((TB, HP), jnp.float32),   # resonance
                            pltpu.VMEM((TB, HP), jnp.float32)],  # z_total
            compiler_params=pltpu.CompilerParams(
                dimension_semantics=("parallel", "arbitrary"),
                vmem_limit_bytes=vmem_limit),
            cost_estimate=cost,
        )(xp, packed["w_in"], packed["b_in"], packed["w_layers"],
          packed["b_layers"], packed["w_out"], packed["b_out"])

    try:
        out_p, xfin_p = run(True)
    except Exception:
        # Fallback if this Pallas build rejects pipeline_mode=pl.Buffered(1).
        out_p, xfin_p = run(False)

    # Strip batch and lane padding.
    return out_p[:B, :O], xfin_p[:B, :H]


def init_params(key, input_size, hidden_size, output_size, num_layers):
    """Deterministic init mimicking nn.Linear's U(-1/sqrt(fan_in), 1/sqrt(fan_in)).

    Weights stored pre-transposed as [in_dim, out_dim]; biases as [1, out_dim].
    """
    ks = jax.random.split(key, 6)

    def linear(kw, kb, fan_in, fan_out):
        bound = 1.0 / math.sqrt(fan_in)
        w = jax.random.uniform(kw, (fan_in, fan_out), jnp.float32, -bound, bound)
        b = jax.random.uniform(kb, (1, fan_out), jnp.float32, -bound, bound)
        return w, b

    w_in, b_in = linear(ks[0], ks[1], input_size, hidden_size)

    wls, bls = [], []
    kw, kb = jax.random.split(ks[2])
    for _ in range(num_layers):
        kw, kwi = jax.random.split(kw)
        kb, kbi = jax.random.split(kb)
        w, b = linear(kwi, kbi, hidden_size, hidden_size)
        wls.append(w)
        bls.append(b)
    w_layers = jnp.stack(wls)                 # [L, H, H]
    b_layers = jnp.stack(bls)                 # [L, 1, H]

    w_out, b_out = linear(ks[3], ks[4], hidden_size, output_size)

    return {
        "w_in": w_in, "b_in": b_in,
        "w_layers": w_layers, "b_layers": b_layers,
        "w_out": w_out, "b_out": b_out,
    }


def _pad_to(a, shape):
    pads = [(0, t - s) for s, t in zip(a.shape, shape)]
    return jnp.pad(a, pads)


def pack_params(params, lane=LANE):
    """Zero-pads input/hidden/output feature dims to 128 lanes and casts matmul
    weights to bf16 (biases stay f32).  Zero padding is exact: padded lanes stay
    identically zero through SELU/tanh/resonance, so slicing recovers the
    unpadded result."""
    IN, H = params["w_in"].shape
    O = params["w_out"].shape[1]
    L = params["w_layers"].shape[0]
    INP = _round_up(max(IN, lane), lane)
    HP = _round_up(max(H, lane), lane)
    OP = _round_up(max(O, lane), lane)
    return {
        "w_in": _pad_to(params["w_in"], (INP, HP)).astype(jnp.bfloat16),
        "b_in": _pad_to(params["b_in"], (1, HP)).astype(jnp.float32),
        "w_layers": _pad_to(params["w_layers"], (L, HP, HP)).astype(jnp.bfloat16),
        "b_layers": _pad_to(params["b_layers"], (L, 1, HP)).astype(jnp.float32),
        "w_out": _pad_to(params["w_out"], (HP, OP)).astype(jnp.bfloat16),
        "b_out": _pad_to(params["b_out"], (1, OP)).astype(jnp.float32),
        "hidden_size": H, "output_size": O, "input_size": IN,
    }


def reference_forward(x, params):
    """Plain-JAX f32 reference for correctness checking."""
    L = params["w_layers"].shape[0]
    h = _selu(x @ params["w_in"] + params["b_in"])
    resonance = jnp.zeros_like(h)
    z_total = jnp.zeros_like(h)
    for i in range(L):
        h = (h + resonance) @ params["w_layers"][i] + params["b_layers"][i]
        z = _selu(h)
        resonance = 0.8 * resonance + 0.2 * z
        z_total = z_total + z
        h = jnp.tanh(z_total / float(L))
    out = h @ params["w_out"] + params["b_out"]
    return out, h


if __name__ == "__main__":
    # Small, forward-consistent shapes: batch=24, input(bert_embed dim)=64,
    # hidden=32, output(num emotion classes)=8, num_layers=3.
    batch, input_size, hidden_size, output_size, num_layers = 24, 64, 32, 8, 3

    key = jax.random.PRNGKey(0)
    k_x, k_p = jax.random.split(key)
    x = jax.random.normal(k_x, (batch, input_size), jnp.float32)
    # emotion_ids exist in the torch signature but are unused on the
    # use_backprop=True path; kept only for shape documentation.
    emotion_ids = jnp.arange(batch, dtype=jnp.int32) % output_size

    params = init_params(k_p, input_size, hidden_size, output_size, num_layers)
    packed = pack_params(params)
    ref_out, ref_x = reference_forward(x, params)

    # bf16 MXU operands (+ bf16 elementwise chain on v6e/v7x) vs f32 reference.
    tol = 5e-2
    for force_stream in (None, True):       # exercise resident AND streamed paths
        out, x_final = neural_network_forward(x, packed, force_stream=force_stream)
        jax.block_until_ready((out, x_final))
        assert out.shape == (batch, output_size)
        assert x_final.shape == (batch, hidden_size)
        assert jnp.allclose(out, ref_out, atol=tol, rtol=tol), (
            force_stream, float(jnp.max(jnp.abs(out - ref_out))))
        assert jnp.allclose(x_final, ref_x, atol=tol, rtol=tol), (
            force_stream, float(jnp.max(jnp.abs(x_final - ref_x))))

    print("KERNEL_OK")
</pallas_src>

<mosaic_0001>
module attributes {stable_mosaic.version = 11 : i64} {
  func.func @kernel(%arg0: i32, %arg1: i32, %arg2: memref<16x128xbf16, #tpu.memory_space<vmem>>, %arg3: memref<128x128xbf16, #tpu.memory_space<vmem>>, %arg4: memref<1x128xf32, #tpu.memory_space<vmem>>, %arg5: memref<3x128x128xbf16, #tpu.memory_space<vmem>>, %arg6: memref<3x1x128xf32, #tpu.memory_space<vmem>>, %arg7: memref<128x128xbf16, #tpu.memory_space<vmem>>, %arg8: memref<1x128xf32, #tpu.memory_space<vmem>>, %arg9: memref<16x128xf32, #tpu.memory_space<vmem>>, %arg10: memref<16x128xf32, #tpu.memory_space<vmem>>, %arg11: memref<16x128xf32, #tpu.memory_space<vmem>>, %arg12: memref<16x128xf32, #tpu.memory_space<vmem>>, %arg13: memref<16x128xf32, #tpu.memory_space<vmem>>) attributes {dimension_semantics = [#tpu.dimension_semantics<parallel>, #tpu.dimension_semantics<arbitrary>], iteration_bounds = array<i64: 2, 3>, scalar_prefetch = 0 : i64, scratch_operands = 3 : i64, tpu.core_type = #tpu.core_type<tc>, window_params = [{transform_indices = @transform_0, window_bounds = array<i64: 16, 128>}, {pipeline_mode = #tpu.pipeline_mode<synchronous>, transform_indices = @transform_1, window_bounds = array<i64: 128, 128>}, {pipeline_mode = #tpu.pipeline_mode<synchronous>, transform_indices = @transform_2, window_bounds = array<i64: 1, 128>}, {pipeline_mode = #tpu.pipeline_mode<synchronous>, transform_indices = @transform_3, window_bounds = array<i64: 3, 128, 128>}, {pipeline_mode = #tpu.pipeline_mode<synchronous>, transform_indices = @transform_4, window_bounds = array<i64: 3, 1, 128>}, {pipeline_mode = #tpu.pipeline_mode<synchronous>, transform_indices = @transform_5, window_bounds = array<i64: 128, 128>}, {pipeline_mode = #tpu.pipeline_mode<synchronous>, transform_indices = @transform_6, window_bounds = array<i64: 1, 128>}, {transform_indices = @transform_7, window_bounds = array<i64: 16, 128>}, {transform_indices = @transform_8, window_bounds = array<i64: 16, 128>}]} {
    %c0_i32 = arith.constant 0 : i32
    %0 = arith.cmpi eq, %arg1, %c0_i32 : i32
    %1 = arith.extui %0 : i1 to i32
    %c0_i32_0 = arith.constant 0 : i32
    %2 = arith.cmpi ne, %1, %c0_i32_0 : i32
    scf.if %2 {
      %c0_26 = arith.constant 0 : index
      %c0_27 = arith.constant 0 : index
      %43 = vector.load %arg2[%c0_26, %c0_27] : memref<16x128xbf16, #tpu.memory_space<vmem>>, vector<16x128xbf16>
      %c0_28 = arith.constant 0 : index
      %c0_29 = arith.constant 0 : index
      %44 = vector.load %arg3[%c0_28, %c0_29] : memref<128x128xbf16, #tpu.memory_space<vmem>>, vector<128x128xbf16>
      %cst_30 = arith.constant dense<0.000000e+00> : vector<16x128xf32>
      %45 = tpu.matmul %43, %44, %cst_30 {dimension_numbers = #tpu.dot_dimension_numbers<[1], [0], [0], [1], [0, 0, 1, 1], [], []>} : vector<16x128xbf16>, vector<128x128xbf16>, vector<16x128xf32> -> vector<16x128xf32>
      %c0_31 = arith.constant 0 : index
      %c0_32 = arith.constant 0 : index
      %46 = vector.load %arg4[%c0_31, %c0_32] : memref<1x128xf32, #tpu.memory_space<vmem>>, vector<1x128xf32>
      %47 = vector.broadcast %46 : vector<1x128xf32> to vector<16x128xf32>
      %48 = arith.addf %45, %47 : vector<16x128xf32>
      %cst_33 = arith.constant 0.000000e+00 : f32
      %49 = vector.broadcast %cst_33 : f32 to vector<16x128xf32>
      %50 = arith.cmpf ogt, %48, %49 : vector<16x128xf32>
      %51 = math.exp %48 : vector<16x128xf32>
      %cst_34 = arith.constant 1.000000e+00 : f32
      %52 = vector.broadcast %cst_34 : f32 to vector<16x128xf32>
      %53 = arith.subf %51, %52 : vector<16x128xf32>
      %cst_35 = arith.constant 1.67326319 : f32
      %54 = vector.broadcast %cst_35 : f32 to vector<16x128xf32>
      %55 = arith.mulf %54, %53 : vector<16x128xf32>
      %56 = arith.select %50, %48, %55 : vector<16x128xi1>, vector<16x128xf32>
      %cst_36 = arith.constant 1.05070102 : f32
      %57 = vector.broadcast %cst_36 : f32 to vector<16x128xf32>
      %58 = arith.mulf %57, %56 : vector<16x128xf32>
      %c0_37 = arith.constant 0 : index
      %c0_38 = arith.constant 0 : index
      %59 = vector.load %arg11[%c0_37, %c0_38] : memref<16x128xf32, #tpu.memory_space<vmem>>, vector<16x128xf32>
      tpu.vector_store %arg11[%c0_37, %c0_38], %58 {strides = array<i32>} : memref<16x128xf32, #tpu.memory_space<vmem>>, vector<16x128xf32>,
      %cst_39 = arith.constant 0.000000e+00 : f32
      %60 = vector.broadcast %cst_39 : f32 to vector<16x128xf32>
      %c0_40 = arith.constant 0 : index
      %c0_41 = arith.constant 0 : index
      %61 = vector.load %arg12[%c0_40, %c0_41] : memref<16x128xf32, #tpu.memory_space<vmem>>, vector<16x128xf32>
      tpu.vector_store %arg12[%c0_40, %c0_41], %60 {strides = array<i32>} : memref<16x128xf32, #tpu.memory_space<vmem>>, vector<16x128xf32>,
      %cst_42 = arith.constant 0.000000e+00 : f32
      %62 = vector.broadcast %cst_42 : f32 to vector<16x128xf32>
      %c0_43 = arith.constant 0 : index
      %c0_44 = arith.constant 0 : index
      %63 = vector.load %arg13[%c0_43, %c0_44] : memref<16x128xf32, #tpu.memory_space<vmem>>, vector<16x128xf32>
      tpu.vector_store %arg13[%c0_43, %c0_44], %62 {strides = array<i32>} : memref<16x128xf32, #tpu.memory_space<vmem>>, vector<16x128xf32>,
    } else {
    }
    %3 = arith.index_cast %arg1 : i32 to index
    %c0 = arith.constant 0 : index
    %c0_1 = arith.constant 0 : index
    %4 = vector.load %arg5[%3, %c0, %c0_1] : memref<3x128x128xbf16, #tpu.memory_space<vmem>>, vector<1x128x128xbf16>
    %5 = vector.shape_cast %4 : vector<1x128x128xbf16> to vector<128x128xbf16>
    %6 = arith.index_cast %arg1 : i32 to index
    %c0_2 = arith.constant 0 : index
    %c0_3 = arith.constant 0 : index
    %7 = vector.load %arg6[%6, %c0_2, %c0_3] : memref<3x1x128xf32, #tpu.memory_space<vmem>>, vector<1x1x128xf32>
    %8 = vector.shape_cast %7 : vector<1x1x128xf32> to vector<1x128xf32>
    %c0_4 = arith.constant 0 : index
    %c0_5 = arith.constant 0 : index
    %9 = vector.load %arg11[%c0_4, %c0_5] : memref<16x128xf32, #tpu.memory_space<vmem>>, vector<16x128xf32>
    %c0_6 = arith.constant 0 : index
    %c0_7 = arith.constant 0 : index
    %10 = vector.load %arg12[%c0_6, %c0_7] : memref<16x128xf32, #tpu.memory_space<vmem>>, vector<16x128xf32>
    %11 = arith.addf %9, %10 : vector<16x128xf32>
    %12 = arith.truncf %11 : vector<16x128xf32> to vector<16x128xbf16>
    %cst = arith.constant dense<0.000000e+00> : vector<16x128xf32>
    %13 = tpu.matmul %12, %5, %cst {dimension_numbers = #tpu.dot_dimension_numbers<[1], [0], [0], [1], [0, 0, 1, 1], [], []>} : vector<16x128xbf16>, vector<128x128xbf16>, vector<16x128xf32> -> vector<16x128xf32>
    %14 = vector.broadcast %8 : vector<1x128xf32> to vector<16x128xf32>
    %15 = arith.addf %13, %14 : vector<16x128xf32>
    %cst_8 = arith.constant 0.000000e+00 : f32
    %16 = vector.broadcast %cst_8 : f32 to vector<16x128xf32>
    %17 = arith.cmpf ogt, %15, %16 : vector<16x128xf32>
    %18 = math.exp %15 : vector<16x128xf32>
    %cst_9 = arith.constant 1.000000e+00 : f32
    %19 = vector.broadcast %cst_9 : f32 to vector<16x128xf32>
    %20 = arith.subf %18, %19 : vector<16x128xf32>
    %cst_10 = arith.constant 1.67326319 : f32
    %21 = vector.broadcast %cst_10 : f32 to vector<16x128xf32>
    %22 = arith.mulf %21, %20 : vector<16x128xf32>
    %23 = arith.select %17, %15, %22 : vector<16x128xi1>, vector<16x128xf32>
    %cst_11 = arith.constant 1.05070102 : f32
    %24 = vector.broadcast %cst_11 : f32 to vector<16x128xf32>
    %25 = arith.mulf %24, %23 : vector<16x128xf32>
    %c0_12 = arith.constant 0 : index
    %c0_13 = arith.constant 0 : index
    %26 = vector.load %arg12[%c0_12, %c0_13] : memref<16x128xf32, #tpu.memory_space<vmem>>, vector<16x128xf32>
    %cst_14 = arith.constant 8.000000e-01 : f32
    %27 = vector.broadcast %cst_14 : f32 to vector<16x128xf32>
    %28 = arith.mulf %27, %26 : vector<16x128xf32>
    %cst_15 = arith.constant 2.000000e-01 : f32
    %29 = vector.broadcast %cst_15 : f32 to vector<16x128xf32>
    %30 = arith.mulf %29, %25 : vector<16x128xf32>
    %31 = arith.addf %28, %30 : vector<16x128xf32>
    %c0_16 = arith.constant 0 : index
    %c0_17 = arith.constant 0 : index
    %32 = vector.load %arg13[%c0_16, %c0_17] : memref<16x128xf32, #tpu.memory_space<vmem>>, vector<16x128xf32>
    %33 = arith.addf %32, %25 : vector<16x128xf32>
    %cst_18 = arith.constant 0.333333343 : f32
    %34 = vector.broadcast %cst_18 : f32 to vector<16x128xf32>
    %35 = arith.mulf %33, %34 : vector<16x128xf32>
    %36 = math.tanh %35 : vector<16x128xf32>
    %c0_19 = arith.constant 0 : index
    %c0_20 = arith.constant 0 : index
    %37 = vector.load %arg11[%c0_19, %c0_20] : memref<16x128xf32, #tpu.memory_space<vmem>>, vector<16x128xf32>
    tpu.vector_store %arg11[%c0_19, %c0_20], %36 {strides = array<i32>} : memref<16x128xf32, #tpu.memory_space<vmem>>, vector<16x128xf32>,
    %c0_21 = arith.constant 0 : index
    %c0_22 = arith.constant 0 : index
    %38 = vector.load %arg12[%c0_21, %c0_22] : memref<16x128xf32, #tpu.memory_space<vmem>>, vector<16x128xf32>
    tpu.vector_store %arg12[%c0_21, %c0_22], %31 {strides = array<i32>} : memref<16x128xf32, #tpu.memory_space<vmem>>, vector<16x128xf32>,
    %c0_23 = arith.constant 0 : index
    %c0_24 = arith.constant 0 : index
    %39 = vector.load %arg13[%c0_23, %c0_24] : memref<16x128xf32, #tpu.memory_space<vmem>>, vector<16x128xf32>
    tpu.vector_store %arg13[%c0_23, %c0_24], %33 {strides = array<i32>} : memref<16x128xf32, #tpu.memory_space<vmem>>, vector<16x128xf32>,
    %c2_i32 = arith.constant 2 : i32
    %40 = arith.cmpi eq, %arg1, %c2_i32 : i32
    %41 = arith.extui %40 : i1 to i32
    %c0_i32_25 = arith.constant 0 : i32
    %42 = arith.cmpi ne, %41, %c0_i32_25 : i32
    scf.if %42 {
      %c0_26 = arith.constant 0 : index
      %c0_27 = arith.constant 0 : index
      %43 = vector.load %arg10[%c0_26, %c0_27] : memref<16x128xf32, #tpu.memory_space<vmem>>, vector<16x128xf32>
      tpu.vector_store %arg10[%c0_26, %c0_27], %36 {strides = array<i32>} : memref<16x128xf32, #tpu.memory_space<vmem>>, vector<16x128xf32>,
      %44 = arith.truncf %36 : vector<16x128xf32> to vector<16x128xbf16>
      %c0_28 = arith.constant 0 : index
      %c0_29 = arith.constant 0 : index
      %45 = vector.load %arg7[%c0_28, %c0_29] : memref<128x128xbf16, #tpu.memory_space<vmem>>, vector<128x128xbf16>
      %cst_30 = arith.constant dense<0.000000e+00> : vector<16x128xf32>
      %46 = tpu.matmul %44, %45, %cst_30 {dimension_numbers = #tpu.dot_dimension_numbers<[1], [0], [0], [1], [0, 0, 1, 1], [], []>} : vector<16x128xbf16>, vector<128x128xbf16>, vector<16x128xf32> -> vector<16x128xf32>
      %c0_31 = arith.constant 0 : index
      %c0_32 = arith.constant 0 : index
      %47 = vector.load %arg8[%c0_31, %c0_32] : memref<1x128xf32, #tpu.memory_space<vmem>>, vector<1x128xf32>
      %48 = vector.broadcast %47 : vector<1x128xf32> to vector<16x128xf32>
      %49 = arith.addf %46, %48 : vector<16x128xf32>
      %c0_33 = arith.constant 0 : index
      %c0_34 = arith.constant 0 : index
      %50 = vector.load %arg9[%c0_33, %c0_34] : memref<16x128xf32, #tpu.memory_space<vmem>>, vector<16x128xf32>
      tpu.vector_store %arg9[%c0_33, %c0_34], %49 {strides = array<i32>} : memref<16x128xf32, #tpu.memory_space<vmem>>, vector<16x128xf32>,
    } else {
    }
    return
  }
  func.func @transform_0(%arg0: i32, %arg1: i32) -> (i32, i32) {
    %c0_i32 = arith.constant 0 : i32
    %c0_i32_0 = arith.constant 0 : i32
    return %arg0, %c0_i32 : i32, i32
  }
  func.func @transform_1(%arg0: i32, %arg1: i32) -> (i32, i32) {
    %c0_i32 = arith.constant 0 : i32
    %c0_i32_0 = arith.constant 0 : i32
    %c0_i32_1 = arith.constant 0 : i32
    return %c0_i32, %c0_i32_0 : i32, i32
  }
  func.func @transform_2(%arg0: i32, %arg1: i32) -> (i32, i32) {
    %c0_i32 = arith.constant 0 : i32
    %c0_i32_0 = arith.constant 0 : i32
    %c0_i32_1 = arith.constant 0 : i32
    return %c0_i32, %c0_i32_0 : i32, i32
  }
  func.func @transform_3(%arg0: i32, %arg1: i32) -> (i32, i32, i32) {
    %c0_i32 = arith.constant 0 : i32
    %c0_i32_0 = arith.constant 0 : i32
    %c0_i32_1 = arith.constant 0 : i32
    %c0_i32_2 = arith.constant 0 : i32
    return %c0_i32, %c0_i32_0, %c0_i32_1 : i32, i32, i32
  }
  func.func @transform_4(%arg0: i32, %arg1: i32) -> (i32, i32, i32) {
    %c0_i32 = arith.constant 0 : i32
    %c0_i32_0 = arith.constant 0 : i32
    %c0_i32_1 = arith.constant 0 : i32
    %c0_i32_2 = arith.constant 0 : i32
    return %c0_i32, %c0_i32_0, %c0_i32_1 : i32, i32, i32
  }
  func.func @transform_5(%arg0: i32, %arg1: i32) -> (i32, i32) {
    %c0_i32 = arith.constant 0 : i32
    %c0_i32_0 = arith.constant 0 : i32
    %c0_i32_1 = arith.constant 0 : i32
    return %c0_i32, %c0_i32_0 : i32, i32
  }
  func.func @transform_6(%arg0: i32, %arg1: i32) -> (i32, i32) {
    %c0_i32 = arith.constant 0 : i32
    %c0_i32_0 = arith.constant 0 : i32
    %c0_i32_1 = arith.constant 0 : i32
    return %c0_i32, %c0_i32_0 : i32, i32
  }
  func.func @transform_7(%arg0: i32, %arg1: i32) -> (i32, i32) {
    %c0_i32 = arith.constant 0 : i32
    %c0_i32_0 = arith.constant 0 : i32
    return %arg0, %c0_i32 : i32, i32
  }
  func.func @transform_8(%arg0: i32, %arg1: i32) -> (i32, i32) {
    %c0_i32 = arith.constant 0 : i32
    %c0_i32_0 = arith.constant 0 : i32
    return %arg0, %c0_i32 : i32, i32
  }
}

module attributes {stable_mosaic.version = 11 : i64} {
  func.func @kernel(%arg0: i32, %arg1: i32, %arg2: memref<16x128xbf16, #tpu.memory_space<vmem>>, %arg3: memref<128x128xbf16, #tpu.memory_space<vmem>>, %arg4: memref<1x128xf32, #tpu.memory_space<vmem>>, %arg5: memref<3x128x128xbf16, #tpu.memory_space<vmem>>, %arg6: memref<3x1x128xf32, #tpu.memory_space<vmem>>, %arg7: memref<128x128xbf16, #tpu.memory_space<vmem>>, %arg8: memref<1x128xf32, #tpu.memory_space<vmem>>, %arg9: memref<16x128xf32, #tpu.memory_space<vmem>>, %arg10: memref<16x128xf32, #tpu.memory_space<vmem>>, %arg11: memref<16x128xf32, #tpu.memory_space<vmem>>, %arg12: memref<16x128xf32, #tpu.memory_space<vmem>>, %arg13: memref<16x128xf32, #tpu.memory_space<vmem>>) attributes {dimension_semantics = [#tpu.dimension_semantics<parallel>, #tpu.dimension_semantics<arbitrary>], iteration_bounds = array<i64: 2, 3>, scalar_prefetch = 0 : i64, scratch_operands = 3 : i64, tpu.core_type = #tpu.core_type<tc>, window_params = [{transform_indices = @transform_0, window_bounds = array<i64: 16, 128>}, {pipeline_mode = #tpu.pipeline_mode<synchronous>, transform_indices = @transform_1, window_bounds = array<i64: 128, 128>}, {pipeline_mode = #tpu.pipeline_mode<synchronous>, transform_indices = @transform_2, window_bounds = array<i64: 1, 128>}, {pipeline_mode = #tpu.pipeline_mode<synchronous>, transform_indices = @transform_3, window_bounds = array<i64: 3, 128, 128>}, {pipeline_mode = #tpu.pipeline_mode<synchronous>, transform_indices = @transform_4, window_bounds = array<i64: 3, 1, 128>}, {pipeline_mode = #tpu.pipeline_mode<synchronous>, transform_indices = @transform_5, window_bounds = array<i64: 128, 128>}, {pipeline_mode = #tpu.pipeline_mode<synchronous>, transform_indices = @transform_6, window_bounds = array<i64: 1, 128>}, {transform_indices = @transform_7, window_bounds = array<i64: 16, 128>}, {transform_indices = @transform_8, window_bounds = array<i64: 16, 128>}]} {
    %c0_i32 = arith.constant 0 : i32
    %0 = arith.cmpi eq, %arg1, %c0_i32 : i32
    %1 = arith.extui %0 : i1 to i32
    %c0_i32_0 = arith.constant 0 : i32
    %2 = arith.cmpi ne, %1, %c0_i32_0 : i32
    scf.if %2 {
      %c0_26 = arith.constant 0 : index
      %c0_27 = arith.constant 0 : index
      %43 = vector.load %arg2[%c0_26, %c0_27] : memref<16x128xbf16, #tpu.memory_space<vmem>>, vector<16x128xbf16>
      %c0_28 = arith.constant 0 : index
      %c0_29 = arith.constant 0 : index
      %44 = vector.load %arg3[%c0_28, %c0_29] : memref<128x128xbf16, #tpu.memory_space<vmem>>, vector<128x128xbf16>
      %cst_30 = arith.constant dense<0.000000e+00> : vector<16x128xf32>
      %45 = tpu.matmul %43, %44, %cst_30 {dimension_numbers = #tpu.dot_dimension_numbers<[1], [0], [0], [1], [0, 0, 1, 1], [], []>} : vector<16x128xbf16>, vector<128x128xbf16>, vector<16x128xf32> -> vector<16x128xf32>
      %c0_31 = arith.constant 0 : index
      %c0_32 = arith.constant 0 : index
      %46 = vector.load %arg4[%c0_31, %c0_32] : memref<1x128xf32, #tpu.memory_space<vmem>>, vector<1x128xf32>
      %47 = vector.broadcast %46 : vector<1x128xf32> to vector<16x128xf32>
      %48 = arith.addf %45, %47 : vector<16x128xf32>
      %cst_33 = arith.constant 0.000000e+00 : f32
      %49 = vector.broadcast %cst_33 : f32 to vector<16x128xf32>
      %50 = arith.cmpf ogt, %48, %49 : vector<16x128xf32>
      %51 = math.exp %48 : vector<16x128xf32>
      %cst_34 = arith.constant 1.000000e+00 : f32
      %52 = vector.broadcast %cst_34 : f32 to vector<16x128xf32>
      %53 = arith.subf %51, %52 : vector<16x128xf32>
      %cst_35 = arith.constant 1.67326319 : f32
      %54 = vector.broadcast %cst_35 : f32 to vector<16x128xf32>
      %55 = arith.mulf %54, %53 : vector<16x128xf32>
      %56 = arith.select %50, %48, %55 : vector<16x128xi1>, vector<16x128xf32>
      %cst_36 = arith.constant 1.05070102 : f32
      %57 = vector.broadcast %cst_36 : f32 to vector<16x128xf32>
      %58 = arith.mulf %57, %56 : vector<16x128xf32>
      %c0_37 = arith.constant 0 : index
      %c0_38 = arith.constant 0 : index
      %59 = vector.load %arg11[%c0_37, %c0_38] : memref<16x128xf32, #tpu.memory_space<vmem>>, vector<16x128xf32>
      tpu.vector_store %arg11[%c0_37, %c0_38], %58 {strides = array<i32>} : memref<16x128xf32, #tpu.memory_space<vmem>>, vector<16x128xf32>,
      %cst_39 = arith.constant 0.000000e+00 : f32
      %60 = vector.broadcast %cst_39 : f32 to vector<16x128xf32>
      %c0_40 = arith.constant 0 : index
      %c0_41 = arith.constant 0 : index
      %61 = vector.load %arg12[%c0_40, %c0_41] : memref<16x128xf32, #tpu.memory_space<vmem>>, vector<16x128xf32>
      tpu.vector_store %arg12[%c0_40, %c0_41], %60 {strides = array<i32>} : memref<16x128xf32, #tpu.memory_space<vmem>>, vector<16x128xf32>,
      %cst_42 = arith.constant 0.000000e+00 : f32
      %62 = vector.broadcast %cst_42 : f32 to vector<16x128xf32>
      %c0_43 = arith.constant 0 : index
      %c0_44 = arith.constant 0 : index
      %63 = vector.load %arg13[%c0_43, %c0_44] : memref<16x128xf32, #tpu.memory_space<vmem>>, vector<16x128xf32>
      tpu.vector_store %arg13[%c0_43, %c0_44], %62 {strides = array<i32>} : memref<16x128xf32, #tpu.memory_space<vmem>>, vector<16x128xf32>,
    } else {
    }
    %3 = arith.index_cast %arg1 : i32 to index
    %c0 = arith.constant 0 : index
    %c0_1 = arith.constant 0 : index
    %4 = vector.load %arg5[%3, %c0, %c0_1] : memref<3x128x128xbf16, #tpu.memory_space<vmem>>, vector<1x128x128xbf16>
    %5 = vector.shape_cast %4 : vector<1x128x128xbf16> to vector<128x128xbf16>
    %6 = arith.index_cast %arg1 : i32 to index
    %c0_2 = arith.constant 0 : index
    %c0_3 = arith.constant 0 : index
    %7 = vector.load %arg6[%6, %c0_2, %c0_3] : memref<3x1x128xf32, #tpu.memory_space<vmem>>, vector<1x1x128xf32>
    %8 = vector.shape_cast %7 : vector<1x1x128xf32> to vector<1x128xf32>
    %c0_4 = arith.constant 0 : index
    %c0_5 = arith.constant 0 : index
    %9 = vector.load %arg11[%c0_4, %c0_5] : memref<16x128xf32, #tpu.memory_space<vmem>>, vector<16x128xf32>
    %c0_6 = arith.constant 0 : index
    %c0_7 = arith.constant 0 : index
    %10 = vector.load %arg12[%c0_6, %c0_7] : memref<16x128xf32, #tpu.memory_space<vmem>>, vector<16x128xf32>
    %11 = arith.addf %9, %10 : vector<16x128xf32>
    %12 = arith.truncf %11 : vector<16x128xf32> to vector<16x128xbf16>
    %cst = arith.constant dense<0.000000e+00> : vector<16x128xf32>
    %13 = tpu.matmul %12, %5, %cst {dimension_numbers = #tpu.dot_dimension_numbers<[1], [0], [0], [1], [0, 0, 1, 1], [], []>} : vector<16x128xbf16>, vector<128x128xbf16>, vector<16x128xf32> -> vector<16x128xf32>
    %14 = vector.broadcast %8 : vector<1x128xf32> to vector<16x128xf32>
    %15 = arith.addf %13, %14 : vector<16x128xf32>
    %cst_8 = arith.constant 0.000000e+00 : f32
    %16 = vector.broadcast %cst_8 : f32 to vector<16x128xf32>
    %17 = arith.cmpf ogt, %15, %16 : vector<16x128xf32>
    %18 = math.exp %15 : vector<16x128xf32>
    %cst_9 = arith.constant 1.000000e+00 : f32
    %19 = vector.broadcast %cst_9 : f32 to vector<16x128xf32>
    %20 = arith.subf %18, %19 : vector<16x128xf32>
    %cst_10 = arith.constant 1.67326319 : f32
    %21 = vector.broadcast %cst_10 : f32 to vector<16x128xf32>
    %22 = arith.mulf %21, %20 : vector<16x128xf32>
    %23 = arith.select %17, %15, %22 : vector<16x128xi1>, vector<16x128xf32>
    %cst_11 = arith.constant 1.05070102 : f32
    %24 = vector.broadcast %cst_11 : f32 to vector<16x128xf32>
    %25 = arith.mulf %24, %23 : vector<16x128xf32>
    %c0_12 = arith.constant 0 : index
    %c0_13 = arith.constant 0 : index
    %26 = vector.load %arg12[%c0_12, %c0_13] : memref<16x128xf32, #tpu.memory_space<vmem>>, vector<16x128xf32>
    %cst_14 = arith.constant 8.000000e-01 : f32
    %27 = vector.broadcast %cst_14 : f32 to vector<16x128xf32>
    %28 = arith.mulf %27, %26 : vector<16x128xf32>
    %cst_15 = arith.constant 2.000000e-01 : f32
    %29 = vector.broadcast %cst_15 : f32 to vector<16x128xf32>
    %30 = arith.mulf %29, %25 : vector<16x128xf32>
    %31 = arith.addf %28, %30 : vector<16x128xf32>
    %c0_16 = arith.constant 0 : index
    %c0_17 = arith.constant 0 : index
    %32 = vector.load %arg13[%c0_16, %c0_17] : memref<16x128xf32, #tpu.memory_space<vmem>>, vector<16x128xf32>
    %33 = arith.addf %32, %25 : vector<16x128xf32>
    %cst_18 = arith.constant 0.333333343 : f32
    %34 = vector.broadcast %cst_18 : f32 to vector<16x128xf32>
    %35 = arith.mulf %33, %34 : vector<16x128xf32>
    %36 = math.tanh %35 : vector<16x128xf32>
    %c0_19 = arith.constant 0 : index
    %c0_20 = arith.constant 0 : index
    %37 = vector.load %arg11[%c0_19, %c0_20] : memref<16x128xf32, #tpu.memory_space<vmem>>, vector<16x128xf32>
    tpu.vector_store %arg11[%c0_19, %c0_20], %36 {strides = array<i32>} : memref<16x128xf32, #tpu.memory_space<vmem>>, vector<16x128xf32>,
    %c0_21 = arith.constant 0 : index
    %c0_22 = arith.constant 0 : index
    %38 = vector.load %arg12[%c0_21, %c0_22] : memref<16x128xf32, #tpu.memory_space<vmem>>, vector<16x128xf32>
    tpu.vector_store %arg12[%c0_21, %c0_22], %31 {strides = array<i32>} : memref<16x128xf32, #tpu.memory_space<vmem>>, vector<16x128xf32>,
    %c0_23 = arith.constant 0 : index
    %c0_24 = arith.constant 0 : index
    %39 = vector.load %arg13[%c0_23, %c0_24] : memref<16x128xf32, #tpu.memory_space<vmem>>, vector<16x128xf32>
    tpu.vector_store %arg13[%c0_23, %c0_24], %33 {strides = array<i32>} : memref<16x128xf32, #tpu.memory_space<vmem>>, vector<16x128xf32>,
    %c2_i32 = arith.constant 2 : i32
    %40 = arith.cmpi eq, %arg1, %c2_i32 : i32
    %41 = arith.extui %40 : i1 to i32
    %c0_i32_25 = arith.constant 0 : i32
    %42 = arith.cmpi ne, %41, %c0_i32_25 : i32
    scf.if %42 {
      %c0_26 = arith.constant 0 : index
      %c0_27 = arith.constant 0 : index
      %43 = vector.load %arg10[%c0_26, %c0_27] : memref<16x128xf32, #tpu.memory_space<vmem>>, vector<16x128xf32>
      tpu.vector_store %arg10[%c0_26, %c0_27], %36 {strides = array<i32>} : memref<16x128xf32, #tpu.memory_space<vmem>>, vector<16x128xf32>,
      %44 = arith.truncf %36 : vector<16x128xf32> to vector<16x128xbf16>
      %c0_28 = arith.constant 0 : index
      %c0_29 = arith.constant 0 : index
      %45 = vector.load %arg7[%c0_28, %c0_29] : memref<128x128xbf16, #tpu.memory_space<vmem>>, vector<128x128xbf16>
      %cst_30 = arith.constant dense<0.000000e+00> : vector<16x128xf32>
      %46 = tpu.matmul %44, %45, %cst_30 {dimension_numbers = #tpu.dot_dimension_numbers<[1], [0], [0], [1], [0, 0, 1, 1], [], []>} : vector<16x128xbf16>, vector<128x128xbf16>, vector<16x128xf32> -> vector<16x128xf32>
      %c0_31 = arith.constant 0 : index
      %c0_32 = arith.constant 0 : index
      %47 = vector.load %arg8[%c0_31, %c0_32] : memref<1x128xf32, #tpu.memory_space<vmem>>, vector<1x128xf32>
      %48 = vector.broadcast %47 : vector<1x128xf32> to vector<16x128xf32>
      %49 = arith.addf %46, %48 : vector<16x128xf32>
      %c0_33 = arith.constant 0 : index
      %c0_34 = arith.constant 0 : index
      %50 = vector.load %arg9[%c0_33, %c0_34] : memref<16x128xf32, #tpu.memory_space<vmem>>, vector<16x128xf32>
      tpu.vector_store %arg9[%c0_33, %c0_34], %49 {strides = array<i32>} : memref<16x128xf32, #tpu.memory_space<vmem>>, vector<16x128xf32>,
    } else {
    }
    return
  }
  func.func @transform_0(%arg0: i32, %arg1: i32) -> (i32, i32) {
    %c0_i32 = arith.constant 0 : i32
    %c0_i32_0 = arith.constant 0 : i32
    return %arg0, %c0_i32 : i32, i32
  }
  func.func @transform_1(%arg0: i32, %arg1: i32) -> (i32, i32) {
    %c0_i32 = arith.constant 0 : i32
    %c0_i32_0 = arith.constant 0 : i32
    %c0_i32_1 = arith.constant 0 : i32
    return %c0_i32, %c0_i32_0 : i32, i32
  }
  func.func @transform_2(%arg0: i32, %arg1: i32) -> (i32, i32) {
    %c0_i32 = arith.constant 0 : i32
    %c0_i32_0 = arith.constant 0 : i32
    %c0_i32_1 = arith.constant 0 : i32
    return %c0_i32, %c0_i32_0 : i32, i32
  }
  func.func @transform_3(%arg0: i32, %arg1: i32) -> (i32, i32, i32) {
    %c0_i32 = arith.constant 0 : i32
    %c0_i32_0 = arith.constant 0 : i32
    %c0_i32_1 = arith.constant 0 : i32
    %c0_i32_2 = arith.constant 0 : i32
    return %c0_i32, %c0_i32_0, %c0_i32_1 : i32, i32, i32
  }
  func.func @transform_4(%arg0: i32, %arg1: i32) -> (i32, i32, i32) {
    %c0_i32 = arith.constant 0 : i32
    %c0_i32_0 = arith.constant 0 : i32
    %c0_i32_1 = arith.constant 0 : i32
    %c0_i32_2 = arith.constant 0 : i32
    return %c0_i32, %c0_i32_0, %c0_i32_1 : i32, i32, i32
  }
  func.func @transform_5(%arg0: i32, %arg1: i32) -> (i32, i32) {
    %c0_i32 = arith.constant 0 : i32
    %c0_i32_0 = arith.constant 0 : i32
    %c0_i32_1 = arith.constant 0 : i32
    return %c0_i32, %c0_i32_0 : i32, i32
  }
  func.func @transform_6(%arg0: i32, %arg1: i32) -> (i32, i32) {
    %c0_i32 = arith.constant 0 : i32
    %c0_i32_0 = arith.constant 0 : i32
    %c0_i32_1 = arith.constant 0 : i32
    return %c0_i32, %c0_i32_0 : i32, i32
  }
  func.func @transform_7(%arg0: i32, %arg1: i32) -> (i32, i32) {
    %c0_i32 = arith.constant 0 : i32
    %c0_i32_0 = arith.constant 0 : i32
    return %arg0, %c0_i32 : i32, i32
  }
  func.func @transform_8(%arg0: i32, %arg1: i32) -> (i32, i32) {
    %c0_i32 = arith.constant 0 : i32
    %c0_i32_0 = arith.constant 0 : i32
    return %arg0, %c0_i32 : i32, i32
  }
}

</mosaic_0001>

<llo_original>
// kernel: tpu_custom_call.1
$region0: #{tpu_custom_call.1}
  #allocation0 [shape = 'u32[]', space=smem, size = 0x4, offset = 0x4, fixed_abs, tag = 'smem constant byte address 0x4 - core index']
  #allocation1 [shape = 'u32[144,128]{1,0:T(1,128)}', space=vmem, size = 0x12000, scoped, tag = 'internal scratch']
  #allocation2 [shape = 'f32[16,128]{1,0:T(8,128)}', space=vmem, size = 0x2000, scoped, tag = 'scratch operand']
  #allocation3 [shape = 'f32[16,128]{1,0:T(8,128)}', space=vmem, size = 0x2000, scoped, tag = 'scratch operand']
  #allocation4 [shape = 'f32[16,128]{1,0:T(8,128)}', space=vmem, size = 0x2000, scoped, tag = 'scratch operand']
  %s0 = inlined_call_operand.hbm [shape: bf16[32,128], index: 0, kind: input, shape index: {}]
  %s1 = inlined_call_operand.hbm [shape: bf16[128,128], index: 1, kind: input, shape index: {}]
  %s2 = inlined_call_operand.vmem [shape: f32[1,128], index: 2, kind: input, shape index: {}]
  %s3 = inlined_call_operand.hbm [shape: bf16[3,128,128], index: 3, kind: input, shape index: {}]
  %s4 = inlined_call_operand.vmem [shape: f32[3,1,128], index: 4, kind: input, shape index: {}]
  %s5 = inlined_call_operand.hbm [shape: bf16[128,128], index: 5, kind: input, shape index: {}]
  %s6 = inlined_call_operand.vmem [shape: f32[1,128], index: 6, kind: input, shape index: {}]
  %s7 = inlined_call_operand.hbm [shape: f32[32,128], index: 7, kind: output, shape index: {0}]
  %s8 = inlined_call_operand.hbm [shape: f32[32,128], index: 8, kind: output, shape index: {1}]
  %9 = xla_tuple %s7, %s8
  %s10 = sld [smem:[#allocation0]]
  $region93: #{tpu_custom_call.1} parent=0
    _
  %s12 = ssub.s32 1, %s10
  %s13 = scalar_select 0, %s12, %s10
  $region1: #{tpu_custom_call.1} parent=0
    #allocation5 [shape = 'u8[8192]{0}', space=vmem, size = 0x2000, scoped, tag = 'input window, operand 0']
    #allocation6 [shape = 's32[2]{0}', space=sflag, size = 0x8, scoped, tag = 'scoped memory for tpu_custom_call.1']
    #allocation7 [shape = 's32[2]{0}', space=sflag, size = 0x8, scoped, tag = 'scoped memory for tpu_custom_call.1']
    #allocation8 [shape = 'u8[32768]{0}', space=vmem, size = 0x8000, scoped, tag = 'input window, operand 1, single buffered']
    #allocation9 [shape = 's32[1]{0}', space=sflag, size = 0x4, scoped, tag = 'scoped memory for tpu_custom_call.1']
    #allocation10 [shape = 'u8[98304]{0}', space=vmem, size = 0x18000, scoped, tag = 'input window, operand 3, single buffered']
    #allocation11 [shape = 'u8[32768]{0}', space=vmem, size = 0x8000, scoped, tag = 'input window, operand 5, single buffered']
    #allocation12 [shape = 's32[1]{0}', space=sflag, size = 0x4, scoped, tag = 'scoped memory for tpu_custom_call.1']
    #allocation13 [shape = 'u8[16384]{0}', space=vmem, size = 0x4000, scoped, tag = 'output window, operand 0']
    #allocation14 [shape = 'u8[16384]{0}', space=vmem, size = 0x4000, scoped, tag = 'output window, operand 1']
    #allocation15 [shape = 's32[2]{0}', space=sflag, size = 0x8, scoped, tag = 'scoped memory for tpu_custom_call.1']
    %14 = vsyncpa [#allocation6], 0
    %s15 = scalar_lea.sflag [#allocation6], 1
    %16 = vsyncpa %s15, 0
    %17 = vsyncpa [#allocation9], 0
    %18 = vsyncpa [#allocation12], 0
    %19 = vsyncpa [#allocation7], 0
    %s20 = scalar_lea.sflag [#allocation7], 1
    %21 = vsyncpa %s20, 0
    %22 = vsyncpa [#allocation15], 0
    %s23 = scalar_lea.sflag [#allocation15], 1
    %24 = vsyncpa %s23, 0
    loop: start=0, step=1, limit=8
    $region2: #{tpu_custom_call.1} parent=1 // loop_pre_header
      _
    $region3: #{tpu_custom_call.1} parent=1 // loop_header
      %s26 = sphi 0, %s30
      %p27 = scmp.ge.s32.totalorder %s26, 8
      %s33 = sphi 0, %s45
      %s34 = sphi 0, %s41
      %s35 = sphi 0, %s33
      %s36 = sphi 0, %s34
      %s37 = sphi 0, %s35
      %s38 = sphi 0, %s36
      %s48 = sphi 0, %s50
      %s51 = sphi 0, %s48
      %s52 = sphi 0, %s51
      %s68 = sphi 0, %s52
      %s72 = sphi 0, %s72
      %s74 = sphi 0, %s72
      %s75 = sphi 0, %s74
      %s89 = sphi 0, %s75
      %s93 = sphi 0, %s93
      %s95 = sphi 0, %s93
      %s96 = sphi 0, %s95
      %s110 = sphi 0, %s96
      %s114 = sphi 0, %s114
      %s116 = sphi 0, %s114
      %s117 = sphi 0, %s116
      %s131 = sphi 0, %s117
      %s135 = sphi 0, %s135
      %s137 = sphi 0, %s135
      %s138 = sphi 0, %s137
      %s152 = sphi 0, %s138
      %s156 = sphi 0, %s156
      %s158 = sphi 0, %s156
      %s159 = sphi 0, %s158
      %s173 = sphi 0, %s159
      %s177 = sphi 0, %s177
      %s179 = sphi 0, %s177
      %s180 = sphi 0, %s179
      %s194 = sphi 0, %s180
      %s200 = sphi 0, %s202
      %s203 = sphi 0, %s200
      %s204 = sphi 0, %s203
      %s220 = sphi 0, %s204
      %s226 = sphi 0, %s228
      %s229 = sphi 0, %s226
      %s230 = sphi 0, %s229
      %s246 = sphi 0, %s230
    $region4: #{tpu_custom_call.1} parent=1 // loop_header_branch
      %29 = sbr.rel (%p27) target = $region8
    $region5: #{tpu_custom_call.1} parent=1 // loop_body
      %s31 = ssub.s32 %s26, 1
      %s32 = ssub.s32 %s26, 2
      %s39 = sadd.s32 1, %s34
      %p40 = scmp.ge.s32.totalorder %s39, 3
      %s41 = scalar_select %p40, 0, %s39
      %s42 = sadd.s32 1, %s33
      %s43 = scalar_select %p40, %s42, %s33
      %p44 = scmp.ge.s32.totalorder %s43, 2
      %s45 = scalar_select %p44, 0, %s43
      %s46 = ssub.s32 %s33, %s45
      %p47 = scmp.eq.s32.totalorder %s46, 0
      %s49 = sadd.s32 %s48, 1
      %s50 = scalar_select %p47, %s48, %s49
      %p53 = pneg %p47
      %p54 = scmp.eq.s32.totalorder %s26, 5
      %p55 = por %p53, %p54
      %p56 = scmp.ne.s32.totalorder %s48, %s51
      %p57 = scmp.eq.s32.totalorder %s26, 0
      %p58 = por %p56, %p57
      %p59 = scmp.ne.s32.totalorder %s48, %s51
      %p60 = scmp.eq.s32.totalorder %s31, 5
      %p61 = por %p59, %p60
      %p62 = scmp.ne.s32.totalorder %s51, %s52
      %p63 = scmp.eq.s32.totalorder %s31, 0
      %p64 = por %p62, %p63
      %p65 = scmp.ne.s32.totalorder %s51, %s52
      %p66 = scmp.eq.s32.totalorder %s32, 5
      %p67 = por %p65, %p66
      %p69 = scmp.ne.s32.totalorder %s52, %s68
      %p70 = scmp.eq.s32.totalorder %s32, 0
      %p71 = por %p69, %p70
      %s73 = sadd.s32 %s72, 1
      %p76 = scmp.eq.s32.totalorder %s26, 5
      %p77 = scmp.ne.s32.totalorder %s72, %s74
      %p78 = scmp.eq.s32.totalorder %s26, 0
      %p79 = por %p77, %p78
      %p80 = scmp.ne.s32.totalorder %s72, %s74
      %p81 = scmp.eq.s32.totalorder %s31, 5
      %p82 = por %p80, %p81
      %p83 = scmp.ne.s32.totalorder %s74, %s75
      %p84 = scmp.eq.s32.totalorder %s31, 0
      %p85 = por %p83, %p84
      %p86 = scmp.ne.s32.totalorder %s74, %s75
      %p87 = scmp.eq.s32.totalorder %s32, 5
      %p88 = por %p86, %p87
      %p90 = scmp.ne.s32.totalorder %s75, %s89
      %p91 = scmp.eq.s32.totalorder %s32, 0
      %p92 = por %p90, %p91
      %s94 = sadd.s32 %s93, 1
      %p97 = scmp.eq.s32.totalorder %s26, 5
      %p98 = scmp.ne.s32.totalorder %s93, %s95
      %p99 = scmp.eq.s32.totalorder %s26, 0
      %p100 = por %p98, %p99
      %p101 = scmp.ne.s32.totalorder %s93, %s95
      %p102 = scmp.eq.s32.totalorder %s31, 5
      %p103 = por %p101, %p102
      %p104 = scmp.ne.s32.totalorder %s95, %s96
      %p105 = scmp.eq.s32.totalorder %s31, 0
      %p106 = por %p104, %p105
      %p107 = scmp.ne.s32.totalorder %s95, %s96
      %p108 = scmp.eq.s32.totalorder %s32, 5
      %p109 = por %p107, %p108
      %p111 = scmp.ne.s32.totalorder %s96, %s110
      %p112 = scmp.eq.s32.totalorder %s32, 0
      %p113 = por %p111, %p112
      %s115 = sadd.s32 %s114, 1
      %p118 = scmp.eq.s32.totalorder %s26, 5
      %p119 = scmp.ne.s32.totalorder %s114, %s116
      %p120 = scmp.eq.s32.totalorder %s26, 0
      %p121 = por %p119, %p120
      %p122 = scmp.ne.s32.totalorder %s114, %s116
      %p123 = scmp.eq.s32.totalorder %s31, 5
      %p124 = por %p122, %p123
      %p125 = scmp.ne.s32.totalorder %s116, %s117
      %p126 = scmp.eq.s32.totalorder %s31, 0
      %p127 = por %p125, %p126
      %p128 = scmp.ne.s32.totalorder %s116, %s117
      %p129 = scmp.eq.s32.totalorder %s32, 5
      %p130 = por %p128, %p129
      %p132 = scmp.ne.s32.totalorder %s117, %s131
      %p133 = scmp.eq.s32.totalorder %s32, 0
      %p134 = por %p132, %p133
      %s136 = sadd.s32 %s135, 1
      %p139 = scmp.eq.s32.totalorder %s26, 5
      %p140 = scmp.ne.s32.totalorder %s135, %s137
      %p141 = scmp.eq.s32.totalorder %s26, 0
      %p142 = por %p140, %p141
      %p143 = scmp.ne.s32.totalorder %s135, %s137
      %p144 = scmp.eq.s32.totalorder %s31, 5
      %p145 = por %p143, %p144
      %p146 = scmp.ne.s32.totalorder %s137, %s138
      %p147 = scmp.eq.s32.totalorder %s31, 0
      %p148 = por %p146, %p147
      %p149 = scmp.ne.s32.totalorder %s137, %s138
      %p150 = scmp.eq.s32.totalorder %s32, 5
      %p151 = por %p149, %p150
      %p153 = scmp.ne.s32.totalorder %s138, %s152
      %p154 = scmp.eq.s32.totalorder %s32, 0
      %p155 = por %p153, %p154
      %s157 = sadd.s32 %s156, 1
      %p160 = scmp.eq.s32.totalorder %s26, 5
      %p161 = scmp.ne.s32.totalorder %s156, %s158
      %p162 = scmp.eq.s32.totalorder %s26, 0
      %p163 = por %p161, %p162
      %p164 = scmp.ne.s32.totalorder %s156, %s158
      %p165 = scmp.eq.s32.totalorder %s31, 5
      %p166 = por %p164, %p165
      %p167 = scmp.ne.s32.totalorder %s158, %s159
      %p168 = scmp.eq.s32.totalorder %s31, 0
      %p169 = por %p167, %p168
      %p170 = scmp.ne.s32.totalorder %s158, %s159
      %p171 = scmp.eq.s32.totalorder %s32, 5
      %p172 = por %p170, %p171
      %p174 = scmp.ne.s32.totalorder %s159, %s173
      %p175 = scmp.eq.s32.totalorder %s32, 0
      %p176 = por %p174, %p175
      %s178 = sadd.s32 %s177, 1
      %p181 = scmp.eq.s32.totalorder %s26, 5
      %p182 = scmp.ne.s32.totalorder %s177, %s179
      %p183 = scmp.eq.s32.totalorder %s26, 0
      %p184 = por %p182, %p183
      %p185 = scmp.ne.s32.totalorder %s177, %s179
      %p186 = scmp.eq.s32.totalorder %s31, 5
      %p187 = por %p185, %p186
      %p188 = scmp.ne.s32.totalorder %s179, %s180
      %p189 = scmp.eq.s32.totalorder %s31, 0
      %p190 = por %p188, %p189
      %p191 = scmp.ne.s32.totalorder %s179, %s180
      %p192 = scmp.eq.s32.totalorder %s32, 5
      %p193 = por %p191, %p192
      %p195 = scmp.ne.s32.totalorder %s180, %s194
      %p196 = scmp.eq.s32.totalorder %s32, 0
      %p197 = por %p195, %p196
      %s198 = ssub.s32 %s33, %s45
      %p199 = scmp.eq.s32.totalorder %s198, 0
      %s201 = sadd.s32 %s200, 1
      %s202 = scalar_select %p199, %s200, %s201
      %p205 = pneg %p199
      %p206 = scmp.eq.s32.totalorder %s26, 5
      %p207 = por %p205, %p206
      %p208 = scmp.ne.s32.totalorder %s200, %s203
      %p209 = scmp.eq.s32.totalorder %s26, 0
      %p210 = por %p208, %p209
      %p211 = scmp.ne.s32.totalorder %s200, %s203
      %p212 = scmp.eq.s32.totalorder %s31, 5
      %p213 = por %p211, %p212
      %p214 = scmp.ne.s32.totalorder %s203, %s204
      %p215 = scmp.eq.s32.totalorder %s31, 0
      %p216 = por %p214, %p215
      %p217 = scmp.ne.s32.totalorder %s203, %s204
      %p218 = scmp.eq.s32.totalorder %s32, 5
      %p219 = por %p217, %p218
      %p221 = scmp.ne.s32.totalorder %s204, %s220
      %p222 = scmp.eq.s32.totalorder %s32, 0
      %p223 = por %p221, %p222
      %s224 = ssub.s32 %s33, %s45
      %p225 = scmp.eq.s32.totalorder %s224, 0
      %s227 = sadd.s32 %s226, 1
      %s228 = scalar_select %p225, %s226, %s227
      %p231 = pneg %p225
      %p232 = scmp.eq.s32.totalorder %s26, 5
      %p233 = por %p231, %p232
      %p234 = scmp.ne.s32.totalorder %s226, %s229
      %p235 = scmp.eq.s32.totalorder %s26, 0
      %p236 = por %p234, %p235
      %p237 = scmp.ne.s32.totalorder %s226, %s229
      %p238 = scmp.eq.s32.totalorder %s31, 5
      %p239 = por %p237, %p238
      %p240 = scmp.ne.s32.totalorder %s229, %s230
      %p241 = scmp.eq.s32.totalorder %s31, 0
      %p242 = por %p240, %p241
      %p243 = scmp.ne.s32.totalorder %s229, %s230
      %p244 = scmp.eq.s32.totalorder %s32, 5
      %p245 = por %p243, %p244
      %p247 = scmp.ne.s32.totalorder %s230, %s246
      %p248 = scmp.eq.s32.totalorder %s32, 0
      %p249 = por %p247, %p248
      %p250 = scmp.le.s32.totalorder 1, %s26
      %p251 = scmp.lt.s32.totalorder %s26, 7
      %p252 = pnand %p250, %p251
      %p253 = pneg %p252
      // Predicated region
      $region9: #{tpu_custom_call.1} parent=5 // pred_check
        _
      $region10: #{tpu_custom_call.1} parent=5 // pred_check_branch
        %255 = sbr.rel (%p252) target = $region12
      $region11: #{tpu_custom_call.1} parent=5 // pred_region
        %s256 = ssub.s32 %s26, 1
        // Predicated region
        $region13: #{tpu_custom_call.1} parent=11 // pred_check
          %p257 = pneg %p85
        $region14: #{tpu_custom_call.1} parent=11 // pred_check_branch
          %259 = sbr.rel (%p257) target = $region16
        $region15: #{tpu_custom_call.1} parent=11 // pred_region
          %s261 = ssub.s32 1024, 1024
          %262 = vsyncadd [#allocation9], %s261
          %s263 = sshll.u32 [#allocation8], 4
          %s264 = int_to_ptr.vmem [resolvable:$true] %s263
          %269 = dma.hbm_to_vmem [thread:$0]  %s1, 1024, %s264, [#allocation9], 64, 64, 4
        $region16: #{tpu_custom_call.1} parent=11 // pred_fallthru
          _
        // Predicated region
        $region17: #{tpu_custom_call.1} parent=11 // pred_check
          %p270 = pneg %p106
        $region18: #{tpu_custom_call.1} parent=11 // pred_check_branch
          %272 = sbr.rel (%p270) target = $region20
        $region19: #{tpu_custom_call.1} parent=11 // pred_region
          _
        $region20: #{tpu_custom_call.1} parent=11 // pred_fallthru
          _
        // Predicated region
        $region21: #{tpu_custom_call.1} parent=11 // pred_check
          %p273 = pneg %p127
        $region22: #{tpu_custom_call.1} parent=11 // pred_check_branch
          %275 = sbr.rel (%p273) target = $region24
        $region23: #{tpu_custom_call.1} parent=11 // pred_region
          %s277 = ssub.s32 3072, 3072
          %278 = vsyncadd [#allocation9], %s277
          %s279 = sshll.u32 [#allocation10], 4
          %s280 = int_to_ptr.vmem [resolvable:$true] %s279
          %285 = dma.hbm_to_vmem [thread:$0]  %s3, 3072, %s280, [#allocation9], 64, 64, 4
        $region24: #{tpu_custom_call.1} parent=11 // pred_fallthru
          _
        // Predicated region
        $region25: #{tpu_custom_call.1} parent=11 // pred_check
          %p286 = pneg %p148
        $region26: #{tpu_custom_call.1} parent=11 // pred_check_branch
          %288 = sbr.rel (%p286) target = $region28
        $region27: #{tpu_custom_call.1} parent=11 // pred_region
          _
        $region28: #{tpu_custom_call.1} parent=11 // pred_fallthru
          _
        // Predicated region
        $region29: #{tpu_custom_call.1} parent=11 // pred_check
          %p289 = pneg %p169
        $region30: #{tpu_custom_call.1} parent=11 // pred_check_branch
          %291 = sbr.rel (%p289) target = $region32
        $region31: #{tpu_custom_call.1} parent=11 // pred_region
          %s293 = ssub.s32 1024, 1024
          %294 = vsyncadd [#allocation12], %s293
          %s295 = sshll.u32 [#allocation11], 4
          %s296 = int_to_ptr.vmem [resolvable:$true] %s295
          %301 = dma.hbm_to_vmem [thread:$0]  %s5, 1024, %s296, [#allocation12], 64, 64, 4
        $region32: #{tpu_custom_call.1} parent=11 // pred_fallthru
          _
        // Predicated region
        $region33: #{tpu_custom_call.1} parent=11 // pred_check
          %p302 = pneg %p190
        $region34: #{tpu_custom_call.1} parent=11 // pred_check_branch
          %304 = sbr.rel (%p302) target = $region36
        $region35: #{tpu_custom_call.1} parent=11 // pred_region
          _
        $region36: #{tpu_custom_call.1} parent=11 // pred_fallthru
          _
      $region12: #{tpu_custom_call.1} parent=5 // pred_fallthru
        _
      %p305 = scmp.lt.s32.totalorder %s26, 6
      // Predicated region
      $region37: #{tpu_custom_call.1} parent=5 // pred_check
        %p306 = pneg %p305
      $region38: #{tpu_custom_call.1} parent=5 // pred_check_branch
        %308 = sbr.rel (%p306) target = $region40
      $region39: #{tpu_custom_call.1} parent=5 // pred_region
        // Predicated region
        $region41: #{tpu_custom_call.1} parent=39 // pred_check
          %p309 = pneg %p58
        $region42: #{tpu_custom_call.1} parent=39 // pred_check_branch
          %311 = sbr.rel (%p309) target = $region44
        $region43: #{tpu_custom_call.1} parent=39 // pred_region
          %s312 = sand.u32 %s48, 1
          %s313 = scalar_lea.sflag [#allocation6], %s312
          %s314 = sand.u32 %s48, 1
          %s315 = smul.addr %s314, 8
          %s316 = scalar_lea.vmem [#allocation5], %s315
          %s317 = smul.u32 2, %s33
          %s319 = ssub.s32 128, 128
          %320 = vsyncadd %s313, %s319
          %s321 = smul.addr %s317, 64
          %s322 = scalar_lea.hbm %s0, %s321
          %s323 = sshll.u32 %s316, 4
          %s324 = int_to_ptr.vmem [resolvable:$true] %s323
          %329 = dma.hbm_to_vmem [thread:$0]  %s322, 128, %s324, %s313, 64, 64, 4
        $region44: #{tpu_custom_call.1} parent=39 // pred_fallthru
          _
      $region40: #{tpu_custom_call.1} parent=5 // pred_fallthru
        _
      %p330 = scmp.le.s32.totalorder 1, %s26
      %p331 = scmp.lt.s32.totalorder %s26, 7
      %p332 = pnand %p330, %p331
      %p333 = pneg %p332
      // Predicated region
      $region45: #{tpu_custom_call.1} parent=5 // pred_check
        _
      $region46: #{tpu_custom_call.1} parent=5 // pred_check_branch
        %335 = sbr.rel (%p332) target = $region48
      $region47: #{tpu_custom_call.1} parent=5 // pred_region
        %s336 = ssub.s32 %s26, 1
        %s337 = sand.u32 %s51, 1
        %s338 = scalar_lea.sflag [#allocation6], %s337
        %s339 = sand.u32 %s51, 1
        %s340 = smul.addr %s339, 8
        %s341 = scalar_lea.vmem [#allocation5], %s340
        // Predicated region
        $region49: #{tpu_custom_call.1} parent=47 // pred_check
          %p342 = pneg %p64
        $region50: #{tpu_custom_call.1} parent=47 // pred_check_branch
          %344 = sbr.rel (%p342) target = $region52
        $region51: #{tpu_custom_call.1} parent=47 // pred_region
          %345 = dma.done %s338, 128
        $region52: #{tpu_custom_call.1} parent=47 // pred_fallthru
          _
        // Predicated region
        $region53: #{tpu_custom_call.1} parent=47 // pred_check
          %p346 = pneg %p85
        $region54: #{tpu_custom_call.1} parent=47 // pred_check_branch
          %348 = sbr.rel (%p346) target = $region56
        $region55: #{tpu_custom_call.1} parent=47 // pred_region
          %349 = dma.done [#allocation9], 1024
        $region56: #{tpu_custom_call.1} parent=47 // pred_fallthru
          _
        // Predicated region
        $region57: #{tpu_custom_call.1} parent=47 // pred_check
          %p350 = pneg %p127
        $region58: #{tpu_custom_call.1} parent=47 // pred_check_branch
          %352 = sbr.rel (%p350) target = $region60
        $region59: #{tpu_custom_call.1} parent=47 // pred_region
          %353 = dma.done [#allocation9], 3072
        $region60: #{tpu_custom_call.1} parent=47 // pred_fallthru
          _
        // Predicated region
        $region61: #{tpu_custom_call.1} parent=47 // pred_check
          %p354 = pneg %p169
        $region62: #{tpu_custom_call.1} parent=47 // pred_check_branch
          %356 = sbr.rel (%p354) target = $region64
        $region63: #{tpu_custom_call.1} parent=47 // pred_region
          %357 = dma.done [#allocation12], 1024
        $region64: #{tpu_custom_call.1} parent=47 // pred_fallthru
          _
        %s358 = sand.u32 %s51, 1
        %s359 = scalar_lea.sflag [#allocation6], %s358
        %s360 = sand.u32 %s51, 1
        %s361 = smul.addr %s360, 8
        %s362 = scalar_lea.vmem [#allocation5], %s361
        %p363 = pneg %p64
        %p364 = pneg %p61
        %p365 = pneg %p85
        %p366 = pneg %p82
        %p367 = pneg %p106
        %p368 = pneg %p103
        %p369 = pneg %p127
        %p370 = pneg %p124
        %p371 = pneg %p148
        %p372 = pneg %p145
        %p373 = pneg %p169
        %p374 = pneg %p166
        %p375 = pneg %p190
        %p376 = pneg %p187
        %p377 = pneg %p216
        %p378 = pneg %p213
        %s379 = sand.u32 %s203, 1
        %s380 = scalar_lea.sflag [#allocation7], %s379
        %s381 = sand.u32 %s203, 1
        %s382 = smul.addr %s381, 16
        %s383 = scalar_lea.vmem [#allocation13], %s382
        %p384 = pneg %p242
        %p385 = pneg %p239
        %s386 = sand.u32 %s229, 1
        %s387 = scalar_lea.sflag [#allocation15], %s386
        %s388 = sand.u32 %s229, 1
        %s389 = smul.addr %s388, 16
        %s390 = scalar_lea.vmem [#allocation14], %s389
        %s391 = smul.u32 2, %s35
        %s392 = smul.u32 2, %s35
        %s393 = smul.u32 2, %s35
        %p395 = scmp.eq.s32.totalorder %s36, 0
        // Predicated region
        $region65: #{tpu_custom_call.1} parent=47 // pred_check
          %p396 = pneg %p395
        $region66: #{tpu_custom_call.1} parent=47 // pred_check_branch
          %398 = sbr.rel (%p396) target = $region68
        $region67: #{tpu_custom_call.1} parent=47 // pred_region
          %v399 = vld [vmem:[%s341] sm:$0xf]
          %v400 = vld [vmem:[%s341 + $0x4] sm:$0xf]
          %v401 = vld [vmem:[#allocation8] sm:$0xf]
          %v402 = vld [vmem:[#allocation8 + $0x4] sm:$0xf]
          %v403 = vld [vmem:[#allocation8 + $0x8] sm:$0xf]
          %v404 = vld [vmem:[#allocation8 + $0xc] sm:$0xf]
          %v405 = vld [vmem:[#allocation8 + $0x10] sm:$0xf]
          %v406 = vld [vmem:[#allocation8 + $0x14] sm:$0xf]
          %v407 = vld [vmem:[#allocation8 + $0x18] sm:$0xf]
          %v408 = vld [vmem:[#allocation8 + $0x1c] sm:$0xf]
          %v409 = vld [vmem:[#allocation8 + $0x20] sm:$0xf]
          %v410 = vld [vmem:[#allocation8 + $0x24] sm:$0xf]
          %v411 = vld [vmem:[#allocation8 + $0x28] sm:$0xf]
          %v412 = vld [vmem:[#allocation8 + $0x2c] sm:$0xf]
          %v413 = vld [vmem:[#allocation8 + $0x30] sm:$0xf]
          %v414 = vld [vmem:[#allocation8 + $0x34] sm:$0xf]
          %v415 = vld [vmem:[#allocation8 + $0x38] sm:$0xf]
          %v416 = vld [vmem:[#allocation8 + $0x3c] sm:$0xf]
          %v417 = vld [vmem:[%s2] sm:$0x1]
          %v419 = vlaneseq
          %v420 = vshrl.u32 %v419, 7
          %v421 = vsub.s32 0, %v420
          %v422 = vrot.slane %v417, %v421
          %v426 = vunpack.c.l.b16 %v399
          %v427 = vunpack.c.l.b16 %v400
          %v428 = vpack.c.b16 %v427, %v426
          %v446 = vunpack.c.l.b16 %v401
          %v447 = vunpack.c.l.b16 %v402
          %v448 = vunpack.c.l.b16 %v403
          %v449 = vunpack.c.l.b16 %v404
          %v450 = vunpack.c.l.b16 %v405
          %v451 = vunpack.c.l.b16 %v406
          %v452 = vunpack.c.l.b16 %v407
          %v453 = vunpack.c.l.b16 %v408
          %v454 = vunpack.c.l.b16 %v409
          %v455 = vunpack.c.l.b16 %v410
          %v456 = vunpack.c.l.b16 %v411
          %v457 = vunpack.c.l.b16 %v412
          %v458 = vunpack.c.l.b16 %v413
          %v459 = vunpack.c.l.b16 %v414
          %v460 = vunpack.c.l.b16 %v415
          %v461 = vunpack.c.l.b16 %v416
          %v462 = vpack.c.b16 %v447, %v446
          %v463 = vpack.c.b16 %v449, %v448
          %v464 = vpack.c.b16 %v451, %v450
          %v465 = vpack.c.b16 %v453, %v452
          %v466 = vpack.c.b16 %v455, %v454
          %v467 = vpack.c.b16 %v457, %v456
          %v468 = vpack.c.b16 %v459, %v458
          %v469 = vpack.c.b16 %v461, %v460
          %478 = vmatprep.subr.bf16.mxu0 0
          %479 = vmatpush1.bf16.msra.mxu0 %v469
          %480 = vmatprep.subr.bf16.mxu0 0
          %481 = vmatpush1.bf16.msra.mxu0 %v468
          %482 = vmatprep.subr.bf16.mxu0 0
          %483 = vmatpush1.bf16.msra.mxu0 %v467
          %484 = vmatprep.subr.bf16.mxu0 0
          %485 = vmatpush1.bf16.msra.mxu0 %v466
          %486 = vmatprep.subr.bf16.mxu0 0
          %487 = vmatpush1.bf16.msra.mxu0 %v465
          %488 = vmatprep.subr.bf16.mxu0 0
          %489 = vmatpush1.bf16.msra.mxu0 %v464
          %490 = vmatprep.subr.bf16.mxu0 0
          %491 = vmatpush1.bf16.msra.mxu0 %v463
          %492 = vmatprep.subr.bf16.mxu0 0
          %493 = vmatpush1.bf16.msra.mxu0 %v462
          %494 = vmatprep.subr.bf16.mxu0 0
          %495 = vmatpush2.bf16.msra.mxu0 0
          %496 = vmatprep.subr.bf16.mxu0 0
          %497 = vmatpush2.bf16.msra.mxu0 0
          %498 = vmatprep.subr.bf16.mxu0 0
          %499 = vmatpush2.bf16.msra.mxu0 0
          %500 = vmatprep.subr.bf16.mxu0 0
          %501 = vmatpush2.bf16.msra.mxu0 0
          %502 = vmatprep.subr.bf16.mxu0 0
          %503 = vmatpush2.bf16.msra.mxu0 0
          %504 = vmatprep.subr.bf16.mxu0 0
          %505 = vmatpush2.bf16.msra.mxu0 0
          %506 = vmatprep.subr.bf16.mxu0 0
          %507 = vmatpush2.bf16.msra.mxu0 0
          %508 = vmatprep.subr.bf16.mxu0 0
          %509 = vmatpush2.bf16.msra.mxu0 0
          %510 = vmatprep.mubr.bf16.mxu0 0
          %511 = vmatmul.mubr.bf16.gmra.mxu0 %v428
          %v512 = vpop.f32.mrf.mxu0
          %v513 = vadd.f32 %v422, %v512
          %v514 = vpop.f32.mrf.mxu0
          %v515 = vpop.f32.mrf.mxu0
          %v516 = vadd.f32 %v422, %v515
          %v517 = vpop.f32.mrf.mxu0
          %518 = vdwg.mxu0
          %vm519 = vcmp.gt.f32.partialorder %v513, 0.0
          %vm520 = vcmp.gt.f32.partialorder %v516, 0.0
          %v521 = vmul.f32 %v513, 1.442695
          %v522 = vpow.pop %v521
          %v523 = vmul.f32 %v516, 1.442695
          %v524 = vpow.pop %v523
          %v525 = vsub.f32 %v522, 1.0
          %v526 = vsub.f32 %v524, 1.0
          %v527 = vmul.f32 %v525, 1.6732632
          %v528 = vmul.f32 %v526, 1.6732632
          %v529 = vsel %vm519, %v513, %v527
          %v530 = vsel %vm520, %v516, %v528
          %v531 = vmul.f32 %v529, 1.050701
          %v532 = vmul.f32 %v530, 1.050701
          %533 = vst [vmem:[#allocation2] sm:$0xff] %v531
          %534 = vst [vmem:[#allocation2 + $0x8] sm:$0xff] %v532
          %535 = vst [vmem:[#allocation3] sm:$0xff] 0.0
          %536 = vst [vmem:[#allocation3 + $0x8] sm:$0xff] 0.0
          %537 = vst [vmem:[#allocation4] sm:$0xff] 0.0
          %538 = vst [vmem:[#allocation4 + $0x8] sm:$0xff] 0.0
        $region68: #{tpu_custom_call.1} parent=47 // pred_fallthru
          _
        %s539 = smul.u32 %s36, 16
        %s540 = smul.addr %s539, 4
        %s541 = scalar_lea.vmem [#allocation10], %s540
        %v542 = vld [vmem:[%s541] sm:$0xf]
        %v543 = vld [vmem:[%s541 + $0x4] sm:$0xf]
        %v544 = vld [vmem:[%s541 + $0x8] sm:$0xf]
        %v545 = vld [vmem:[%s541 + $0xc] sm:$0xf]
        %v546 = vld [vmem:[%s541 + $0x10] sm:$0xf]
        %v547 = vld [vmem:[%s541 + $0x14] sm:$0xf]
        %v548 = vld [vmem:[%s541 + $0x18] sm:$0xf]
        %v549 = vld [vmem:[%s541 + $0x1c] sm:$0xf]
        %v550 = vld [vmem:[%s541 + $0x20] sm:$0xf]
        %v551 = vld [vmem:[%s541 + $0x24] sm:$0xf]
        %v552 = vld [vmem:[%s541 + $0x28] sm:$0xf]
        %v553 = vld [vmem:[%s541 + $0x2c] sm:$0xf]
        %v554 = vld [vmem:[%s541 + $0x30] sm:$0xf]
        %v555 = vld [vmem:[%s541 + $0x34] sm:$0xf]
        %v556 = vld [vmem:[%s541 + $0x38] sm:$0xf]
        %v557 = vld [vmem:[%s541 + $0x3c] sm:$0xf]
        %s558 = scalar_lea.vmem %s4, %s36
        %v559 = vld [vmem:[%s558] sm:$0x1]
        %v560 = vld [vmem:[#allocation2] sm:$0xff]
        %v561 = vld [vmem:[#allocation2 + $0x8] sm:$0xff]
        %v562 = vld [vmem:[#allocation3] sm:$0xff]
        %v563 = vld [vmem:[#allocation3 + $0x8] sm:$0xff]
        %v564 = vadd.f32 %v560, %v562
        %v565 = vadd.f32 %v561, %v563
        %v566 = vpack.c.bf16 %v565, %v564
        %v568 = vlaneseq
        %v569 = vshrl.u32 %v568, 7
        %v570 = vsub.s32 0, %v569
        %v571 = vrot.slane %v559, %v570
        %v589 = vunpack.c.l.b16 %v542
        %v590 = vunpack.c.l.b16 %v543
        %v591 = vunpack.c.l.b16 %v544
        %v592 = vunpack.c.l.b16 %v545
        %v593 = vunpack.c.l.b16 %v546
        %v594 = vunpack.c.l.b16 %v547
        %v595 = vunpack.c.l.b16 %v548
        %v596 = vunpack.c.l.b16 %v549
        %v597 = vunpack.c.l.b16 %v550
        %v598 = vunpack.c.l.b16 %v551
        %v599 = vunpack.c.l.b16 %v552
        %v600 = vunpack.c.l.b16 %v553
        %v601 = vunpack.c.l.b16 %v554
        %v602 = vunpack.c.l.b16 %v555
        %v603 = vunpack.c.l.b16 %v556
        %v604 = vunpack.c.l.b16 %v557
        %v605 = vpack.c.b16 %v590, %v589
        %v606 = vpack.c.b16 %v592, %v591
        %v607 = vpack.c.b16 %v594, %v593
        %v608 = vpack.c.b16 %v596, %v595
        %v609 = vpack.c.b16 %v598, %v597
        %v610 = vpack.c.b16 %v600, %v599
        %v611 = vpack.c.b16 %v602, %v601
        %v612 = vpack.c.b16 %v604, %v603
        %621 = vmatprep.subr.bf16.mxu0 0
        %622 = vmatpush1.bf16.msra.mxu0 %v612
        %623 = vmatprep.subr.bf16.mxu0 0
        %624 = vmatpush1.bf16.msra.mxu0 %v611
        %625 = vmatprep.subr.bf16.mxu0 0
        %626 = vmatpush1.bf16.msra.mxu0 %v610
        %627 = vmatprep.subr.bf16.mxu0 0
        %628 = vmatpush1.bf16.msra.mxu0 %v609
        %629 = vmatprep.subr.bf16.mxu0 0
        %630 = vmatpush1.bf16.msra.mxu0 %v608
        %631 = vmatprep.subr.bf16.mxu0 0
        %632 = vmatpush1.bf16.msra.mxu0 %v607
        %633 = vmatprep.subr.bf16.mxu0 0
        %634 = vmatpush1.bf16.msra.mxu0 %v606
        %635 = vmatprep.subr.bf16.mxu0 0
        %636 = vmatpush1.bf16.msra.mxu0 %v605
        %637 = vmatprep.subr.bf16.mxu0 0
        %638 = vmatpush2.bf16.msra.mxu0 0
        %639 = vmatprep.subr.bf16.mxu0 0
        %640 = vmatpush2.bf16.msra.mxu0 0
        %641 = vmatprep.subr.bf16.mxu0 0
        %642 = vmatpush2.bf16.msra.mxu0 0
        %643 = vmatprep.subr.bf16.mxu0 0
        %644 = vmatpush2.bf16.msra.mxu0 0
        %645 = vmatprep.subr.bf16.mxu0 0
        %646 = vmatpush2.bf16.msra.mxu0 0
        %647 = vmatprep.subr.bf16.mxu0 0
        %648 = vmatpush2.bf16.msra.mxu0 0
        %649 = vmatprep.subr.bf16.mxu0 0
        %650 = vmatpush2.bf16.msra.mxu0 0
        %651 = vmatprep.subr.bf16.mxu0 0
        %652 = vmatpush2.bf16.msra.mxu0 0
        %653 = vmatprep.mubr.bf16.mxu0 0
        %654 = vmatmul.mubr.bf16.gmra.mxu0 %v566
        %v655 = vpop.f32.mrf.mxu0
        %v656 = vadd.f32 %v571, %v655
        %v657 = vpop.f32.mrf.mxu0
        %v658 = vpop.f32.mrf.mxu0
        %v659 = vadd.f32 %v571, %v658
        %v660 = vpop.f32.mrf.mxu0
        %661 = vdwg.mxu0
        %vm662 = vcmp.gt.f32.partialorder %v656, 0.0
        %vm663 = vcmp.gt.f32.partialorder %v659, 0.0
        %v664 = vmul.f32 %v656, 1.442695
        %v665 = vpow.pop %v664
        %v666 = vmul.f32 %v659, 1.442695
        %v667 = vpow.pop %v666
        %v668 = vsub.f32 %v665, 1.0
        %v669 = vsub.f32 %v667, 1.0
        %v670 = vmul.f32 %v668, 1.6732632
        %v671 = vmul.f32 %v669, 1.6732632
        %v672 = vsel %vm662, %v656, %v670
        %v673 = vsel %vm663, %v659, %v671
        %v674 = vmul.f32 %v672, 1.050701
        %v675 = vmul.f32 %v673, 1.050701
        %v676 = vmul.f32 %v562, 0.8
        %v677 = vmul.f32 %v563, 0.8
        %v678 = vmul.f32 %v674, 0.2
        %v679 = vmul.f32 %v675, 0.2
        %v680 = vadd.f32 %v676, %v678
        %v681 = vadd.f32 %v677, %v679
        %v682 = vld [vmem:[#allocation4] sm:$0xff]
        %v683 = vld [vmem:[#allocation4 + $0x8] sm:$0xff]
        %v684 = vadd.f32 %v682, %v674
        %v685 = vadd.f32 %v683, %v675
        %v686 = vmul.f32 %v684, 0.33333334
        %v687 = vmul.f32 %v685, 0.33333334
        %v688 = vtanh.pop %v686
        %v689 = vtanh.pop %v687
        %690 = vst [vmem:[#allocation2] sm:$0xff] %v688
        %691 = vst [vmem:[#allocation2 + $0x8] sm:$0xff] %v689
        %692 = vst [vmem:[#allocation3] sm:$0xff] %v680
        %693 = vst [vmem:[#allocation3 + $0x8] sm:$0xff] %v681
        %694 = vst [vmem:[#allocation4] sm:$0xff] %v684
        %695 = vst [vmem:[#allocation4 + $0x8] sm:$0xff] %v685
        %p696 = scmp.eq.s32.totalorder %s36, 2
        // Predicated region
        $region69: #{tpu_custom_call.1} parent=47 // pred_check
          %p697 = pneg %p696
        $region70: #{tpu_custom_call.1} parent=47 // pred_check_branch
          %699 = sbr.rel (%p697) target = $region72
        $region71: #{tpu_custom_call.1} parent=47 // pred_region
          %700 = vst [vmem:[%s390] sm:$0xff] %v688
          %701 = vst [vmem:[%s390 + $0x8] sm:$0xff] %v689
          %v702 = vpack.c.bf16 %v689, %v688
          %v703 = vld [vmem:[#allocation11] sm:$0xf]
          %v704 = vld [vmem:[#allocation11 + $0x4] sm:$0xf]
          %v705 = vld [vmem:[#allocation11 + $0x8] sm:$0xf]
          %v706 = vld [vmem:[#allocation11 + $0xc] sm:$0xf]
          %v707 = vld [vmem:[#allocation11 + $0x10] sm:$0xf]
          %v708 = vld [vmem:[#allocation11 + $0x14] sm:$0xf]
          %v709 = vld [vmem:[#allocation11 + $0x18] sm:$0xf]
          %v710 = vld [vmem:[#allocation11 + $0x1c] sm:$0xf]
          %v711 = vld [vmem:[#allocation11 + $0x20] sm:$0xf]
          %v712 = vld [vmem:[#allocation11 + $0x24] sm:$0xf]
          %v713 = vld [vmem:[#allocation11 + $0x28] sm:$0xf]
          %v714 = vld [vmem:[#allocation11 + $0x2c] sm:$0xf]
          %v715 = vld [vmem:[#allocation11 + $0x30] sm:$0xf]
          %v716 = vld [vmem:[#allocation11 + $0x34] sm:$0xf]
          %v717 = vld [vmem:[#allocation11 + $0x38] sm:$0xf]
          %v718 = vld [vmem:[#allocation11 + $0x3c] sm:$0xf]
          %v719 = vld [vmem:[%s6] sm:$0x1]
          %v721 = vlaneseq
          %v722 = vshrl.u32 %v721, 7
          %v723 = vsub.s32 0, %v722
          %v724 = vrot.slane %v719, %v723
          %v742 = vunpack.c.l.b16 %v703
          %v743 = vunpack.c.l.b16 %v704
          %v744 = vunpack.c.l.b16 %v705
          %v745 = vunpack.c.l.b16 %v706
          %v746 = vunpack.c.l.b16 %v707
          %v747 = vunpack.c.l.b16 %v708
          %v748 = vunpack.c.l.b16 %v709
          %v749 = vunpack.c.l.b16 %v710
          %v750 = vunpack.c.l.b16 %v711
          %v751 = vunpack.c.l.b16 %v712
          %v752 = vunpack.c.l.b16 %v713
          %v753 = vunpack.c.l.b16 %v714
          %v754 = vunpack.c.l.b16 %v715
          %v755 = vunpack.c.l.b16 %v716
          %v756 = vunpack.c.l.b16 %v717
          %v757 = vunpack.c.l.b16 %v718
          %v758 = vpack.c.b16 %v743, %v742
          %v759 = vpack.c.b16 %v745, %v744
          %v760 = vpack.c.b16 %v747, %v746
          %v761 = vpack.c.b16 %v749, %v748
          %v762 = vpack.c.b16 %v751, %v750
          %v763 = vpack.c.b16 %v753, %v752
          %v764 = vpack.c.b16 %v755, %v754
          %v765 = vpack.c.b16 %v757, %v756
          %774 = vmatprep.subr.bf16.mxu0 0
          %775 = vmatpush1.bf16.msra.mxu0 %v765
          %776 = vmatprep.subr.bf16.mxu0 0
          %777 = vmatpush1.bf16.msra.mxu0 %v764
          %778 = vmatprep.subr.bf16.mxu0 0
          %779 = vmatpush1.bf16.msra.mxu0 %v763
          %780 = vmatprep.subr.bf16.mxu0 0
          %781 = vmatpush1.bf16.msra.mxu0 %v762
          %782 = vmatprep.subr.bf16.mxu0 0
          %783 = vmatpush1.bf16.msra.mxu0 %v761
          %784 = vmatprep.subr.bf16.mxu0 0
          %785 = vmatpush1.bf16.msra.mxu0 %v760
          %786 = vmatprep.subr.bf16.mxu0 0
          %787 = vmatpush1.bf16.msra.mxu0 %v759
          %788 = vmatprep.subr.bf16.mxu0 0
          %789 = vmatpush1.bf16.msra.mxu0 %v758
          %790 = vmatprep.subr.bf16.mxu0 0
          %791 = vmatpush2.bf16.msra.mxu0 0
          %792 = vmatprep.subr.bf16.mxu0 0
          %793 = vmatpush2.bf16.msra.mxu0 0
          %794 = vmatprep.subr.bf16.mxu0 0
          %795 = vmatpush2.bf16.msra.mxu0 0
          %796 = vmatprep.subr.bf16.mxu0 0
          %797 = vmatpush2.bf16.msra.mxu0 0
          %798 = vmatprep.subr.bf16.mxu0 0
          %799 = vmatpush2.bf16.msra.mxu0 0
          %800 = vmatprep.subr.bf16.mxu0 0
          %801 = vmatpush2.bf16.msra.mxu0 0
          %802 = vmatprep.subr.bf16.mxu0 0
          %803 = vmatpush2.bf16.msra.mxu0 0
          %804 = vmatprep.subr.bf16.mxu0 0
          %805 = vmatpush2.bf16.msra.mxu0 0
          %806 = vmatprep.mubr.bf16.mxu0 0
          %807 = vmatmul.mubr.bf16.gmra.mxu0 %v702
          %v808 = vpop.f32.mrf.mxu0
          %v809 = vadd.f32 %v724, %v808
          %v810 = vpop.f32.mrf.mxu0
          %v811 = vpop.f32.mrf.mxu0
          %v812 = vadd.f32 %v724, %v811
          %v813 = vpop.f32.mrf.mxu0
          %814 = vdwg.mxu0
          %815 = vst [vmem:[%s383] sm:$0xff] %v809
          %816 = vst [vmem:[%s383 + $0x8] sm:$0xff] %v812
        $region72: #{tpu_custom_call.1} parent=47 // pred_fallthru
          _
        %s817 = sand.u32 %s203, 1
        %s818 = scalar_lea.sflag [#allocation7], %s817
        %s819 = sand.u32 %s203, 1
        %s820 = smul.addr %s819, 16
        %s821 = scalar_lea.vmem [#allocation13], %s820
        %s822 = sand.u32 %s229, 1
        %s823 = scalar_lea.sflag [#allocation15], %s822
        %s824 = sand.u32 %s229, 1
        %s825 = smul.addr %s824, 16
        %s826 = scalar_lea.vmem [#allocation14], %s825
        // Predicated region
        $region73: #{tpu_custom_call.1} parent=47 // pred_check
          %p827 = pneg %p213
        $region74: #{tpu_custom_call.1} parent=47 // pred_check_branch
          %829 = sbr.rel (%p827) target = $region76
        $region75: #{tpu_custom_call.1} parent=47 // pred_region
          %s830 = smul.u32 2, %s35
          %s832 = ssub.s32 256, 256
          %833 = vsyncadd %s818, %s832
          %s834 = smul.addr %s830, 128
          %s835 = scalar_lea.hbm %s7, %s834
          %s836 = sshll.u32 %s821, 4
          %s837 = int_to_ptr.vmem [resolvable:$true] %s836
          %842 = dma.vmem_to_hbm [thread:$0]  %s837, 256, %s835, %s818, 128, 128, 8
        $region76: #{tpu_custom_call.1} parent=47 // pred_fallthru
          _
        // Predicated region
        $region77: #{tpu_custom_call.1} parent=47 // pred_check
          %p843 = pneg %p239
        $region78: #{tpu_custom_call.1} parent=47 // pred_check_branch
          %845 = sbr.rel (%p843) target = $region80
        $region79: #{tpu_custom_call.1} parent=47 // pred_region
          %s846 = smul.u32 2, %s35
          %s848 = ssub.s32 256, 256
          %849 = vsyncadd %s823, %s848
          %s850 = smul.addr %s846, 128
          %s851 = scalar_lea.hbm %s8, %s850
          %s852 = sshll.u32 %s826, 4
          %s853 = int_to_ptr.vmem [resolvable:$true] %s852
          %858 = dma.vmem_to_hbm [thread:$0]  %s853, 256, %s851, %s823, 128, 128, 8
        $region80: #{tpu_custom_call.1} parent=47 // pred_fallthru
          _
      $region48: #{tpu_custom_call.1} parent=5 // pred_fallthru
        _
      %p859 = scmp.le.s32.totalorder 2, %s26
      // Predicated region
      $region81: #{tpu_custom_call.1} parent=5 // pred_check
        %p860 = pneg %p859
      $region82: #{tpu_custom_call.1} parent=5 // pred_check_branch
        %862 = sbr.rel (%p860) target = $region84
      $region83: #{tpu_custom_call.1} parent=5 // pred_region
        %s863 = ssub.s32 %s26, 2
        // Predicated region
        $region85: #{tpu_custom_call.1} parent=83 // pred_check
          %p864 = pneg %p219
        $region86: #{tpu_custom_call.1} parent=83 // pred_check_branch
          %866 = sbr.rel (%p864) target = $region88
        $region87: #{tpu_custom_call.1} parent=83 // pred_region
          %s867 = sand.u32 %s204, 1
          %s868 = scalar_lea.sflag [#allocation7], %s867
          %s869 = sand.u32 %s204, 1
          %s870 = smul.addr %s869, 16
          %s871 = scalar_lea.vmem [#allocation13], %s870
          %872 = dma.done %s868, 256
        $region88: #{tpu_custom_call.1} parent=83 // pred_fallthru
          _
        // Predicated region
        $region89: #{tpu_custom_call.1} parent=83 // pred_check
          %p873 = pneg %p245
        $region90: #{tpu_custom_call.1} parent=83 // pred_check_branch
          %875 = sbr.rel (%p873) target = $region92
        $region91: #{tpu_custom_call.1} parent=83 // pred_region
          %s876 = sand.u32 %s230, 1
          %s877 = scalar_lea.sflag [#allocation15], %s876
          %s878 = sand.u32 %s230, 1
          %s879 = smul.addr %s878, 16
          %s880 = scalar_lea.vmem [#allocation14], %s879
          %881 = dma.done %s877, 256
        $region92: #{tpu_custom_call.1} parent=83 // pred_fallthru
          _
      $region84: #{tpu_custom_call.1} parent=5 // pred_fallthru
        _
    $region6: #{tpu_custom_call.1} parent=1 // loop_footer
      %s30 = sadd.s32 1, %s26
    $region7: #{tpu_custom_call.1} parent=1 // loop_footer_branch
      %25 = sbr.rel target = $region3
    $region8: #{tpu_custom_call.1} parent=1 // loop_exit
      _
    %882 = vsyncpa [#allocation6], 1
    %s883 = scalar_lea.sflag [#allocation6], 1
    %884 = vsyncpa %s883, 1
    %885 = vsyncpa [#allocation9], 1
    %886 = vsyncpa [#allocation12], 1
    %887 = vsyncpa [#allocation7], 1
    %s888 = scalar_lea.sflag [#allocation7], 1
    %889 = vsyncpa %s888, 1
    %890 = vsyncpa [#allocation15], 1
    %s891 = scalar_lea.sflag [#allocation15], 1
    %892 = vsyncpa %s891, 1

// kernel: tpu_custom_call.1
$region0: #{tpu_custom_call.1}
  #allocation0 [shape = 'u32[]', space=smem, size = 0x4, offset = 0x4, fixed_abs, tag = 'smem constant byte address 0x4 - core index']
  #allocation1 [shape = 'u32[144,128]{1,0:T(1,128)}', space=vmem, size = 0x12000, scoped, tag = 'internal scratch']
  #allocation2 [shape = 'f32[16,128]{1,0:T(8,128)}', space=vmem, size = 0x2000, scoped, tag = 'scratch operand']
  #allocation3 [shape = 'f32[16,128]{1,0:T(8,128)}', space=vmem, size = 0x2000, scoped, tag = 'scratch operand']
  #allocation4 [shape = 'f32[16,128]{1,0:T(8,128)}', space=vmem, size = 0x2000, scoped, tag = 'scratch operand']
  %s0 = inlined_call_operand.hbm [shape: bf16[32,128], index: 0, kind: input, shape index: {}]
  %s1 = inlined_call_operand.hbm [shape: bf16[128,128], index: 1, kind: input, shape index: {}]
  %s2 = inlined_call_operand.vmem [shape: f32[1,128], index: 2, kind: input, shape index: {}]
  %s3 = inlined_call_operand.hbm [shape: bf16[3,128,128], index: 3, kind: input, shape index: {}]
  %s4 = inlined_call_operand.vmem [shape: f32[3,1,128], index: 4, kind: input, shape index: {}]
  %s5 = inlined_call_operand.hbm [shape: bf16[128,128], index: 5, kind: input, shape index: {}]
  %s6 = inlined_call_operand.vmem [shape: f32[1,128], index: 6, kind: input, shape index: {}]
  %s7 = inlined_call_operand.hbm [shape: f32[32,128], index: 7, kind: output, shape index: {0}]
  %s8 = inlined_call_operand.hbm [shape: f32[32,128], index: 8, kind: output, shape index: {1}]
  %9 = xla_tuple %s7, %s8
  %s10 = sld [smem:[#allocation0]]
  $region93: #{tpu_custom_call.1} parent=0
    _
  %s12 = ssub.s32 1, %s10
  %s13 = scalar_select 0, %s12, %s10
  $region1: #{tpu_custom_call.1} parent=0
    #allocation5 [shape = 'u8[8192]{0}', space=vmem, size = 0x2000, scoped, tag = 'input window, operand 0']
    #allocation6 [shape = 's32[2]{0}', space=sflag, size = 0x8, scoped, tag = 'scoped memory for tpu_custom_call.1']
    #allocation7 [shape = 's32[2]{0}', space=sflag, size = 0x8, scoped, tag = 'scoped memory for tpu_custom_call.1']
    #allocation8 [shape = 'u8[32768]{0}', space=vmem, size = 0x8000, scoped, tag = 'input window, operand 1, single buffered']
    #allocation9 [shape = 's32[1]{0}', space=sflag, size = 0x4, scoped, tag = 'scoped memory for tpu_custom_call.1']
    #allocation10 [shape = 'u8[98304]{0}', space=vmem, size = 0x18000, scoped, tag = 'input window, operand 3, single buffered']
    #allocation11 [shape = 'u8[32768]{0}', space=vmem, size = 0x8000, scoped, tag = 'input window, operand 5, single buffered']
    #allocation12 [shape = 's32[1]{0}', space=sflag, size = 0x4, scoped, tag = 'scoped memory for tpu_custom_call.1']
    #allocation13 [shape = 'u8[16384]{0}', space=vmem, size = 0x4000, scoped, tag = 'output window, operand 0']
    #allocation14 [shape = 'u8[16384]{0}', space=vmem, size = 0x4000, scoped, tag = 'output window, operand 1']
    #allocation15 [shape = 's32[2]{0}', space=sflag, size = 0x8, scoped, tag = 'scoped memory for tpu_custom_call.1']
    %14 = vsyncpa [#allocation6], 0
    %s15 = scalar_lea.sflag [#allocation6], 1
    %16 = vsyncpa %s15, 0
    %17 = vsyncpa [#allocation9], 0
    %18 = vsyncpa [#allocation12], 0
    %19 = vsyncpa [#allocation7], 0
    %s20 = scalar_lea.sflag [#allocation7], 1
    %21 = vsyncpa %s20, 0
    %22 = vsyncpa [#allocation15], 0
    %s23 = scalar_lea.sflag [#allocation15], 1
    %24 = vsyncpa %s23, 0
    loop: start=0, step=1, limit=8
    $region2: #{tpu_custom_call.1} parent=1 // loop_pre_header
      _
    $region3: #{tpu_custom_call.1} parent=1 // loop_header
      %s26 = sphi 0, %s30
      %p27 = scmp.ge.s32.totalorder %s26, 8
      %s33 = sphi 0, %s45
      %s34 = sphi 0, %s41
      %s35 = sphi 0, %s33
      %s36 = sphi 0, %s34
      %s37 = sphi 0, %s35
      %s38 = sphi 0, %s36
      %s48 = sphi 0, %s50
      %s51 = sphi 0, %s48
      %s52 = sphi 0, %s51
      %s68 = sphi 0, %s52
      %s72 = sphi 0, %s72
      %s74 = sphi 0, %s72
      %s75 = sphi 0, %s74
      %s89 = sphi 0, %s75
      %s93 = sphi 0, %s93
      %s95 = sphi 0, %s93
      %s96 = sphi 0, %s95
      %s110 = sphi 0, %s96
      %s114 = sphi 0, %s114
      %s116 = sphi 0, %s114
      %s117 = sphi 0, %s116
      %s131 = sphi 0, %s117
      %s135 = sphi 0, %s135
      %s137 = sphi 0, %s135
      %s138 = sphi 0, %s137
      %s152 = sphi 0, %s138
      %s156 = sphi 0, %s156
      %s158 = sphi 0, %s156
      %s159 = sphi 0, %s158
      %s173 = sphi 0, %s159
      %s177 = sphi 0, %s177
      %s179 = sphi 0, %s177
      %s180 = sphi 0, %s179
      %s194 = sphi 0, %s180
      %s200 = sphi 0, %s202
      %s203 = sphi 0, %s200
      %s204 = sphi 0, %s203
      %s220 = sphi 0, %s204
      %s226 = sphi 0, %s228
      %s229 = sphi 0, %s226
      %s230 = sphi 0, %s229
      %s246 = sphi 0, %s230
    $region4: #{tpu_custom_call.1} parent=1 // loop_header_branch
      %29 = sbr.rel (%p27) target = $region8
    $region5: #{tpu_custom_call.1} parent=1 // loop_body
      %s31 = ssub.s32 %s26, 1
      %s32 = ssub.s32 %s26, 2
      %s39 = sadd.s32 1, %s34
      %p40 = scmp.ge.s32.totalorder %s39, 3
      %s41 = scalar_select %p40, 0, %s39
      %s42 = sadd.s32 1, %s33
      %s43 = scalar_select %p40, %s42, %s33
      %p44 = scmp.ge.s32.totalorder %s43, 2
      %s45 = scalar_select %p44, 0, %s43
      %s46 = ssub.s32 %s33, %s45
      %p47 = scmp.eq.s32.totalorder %s46, 0
      %s49 = sadd.s32 %s48, 1
      %s50 = scalar_select %p47, %s48, %s49
      %p53 = pneg %p47
      %p54 = scmp.eq.s32.totalorder %s26, 5
      %p55 = por %p53, %p54
      %p56 = scmp.ne.s32.totalorder %s48, %s51
      %p57 = scmp.eq.s32.totalorder %s26, 0
      %p58 = por %p56, %p57
      %p59 = scmp.ne.s32.totalorder %s48, %s51
      %p60 = scmp.eq.s32.totalorder %s31, 5
      %p61 = por %p59, %p60
      %p62 = scmp.ne.s32.totalorder %s51, %s52
      %p63 = scmp.eq.s32.totalorder %s31, 0
      %p64 = por %p62, %p63
      %p65 = scmp.ne.s32.totalorder %s51, %s52
      %p66 = scmp.eq.s32.totalorder %s32, 5
      %p67 = por %p65, %p66
      %p69 = scmp.ne.s32.totalorder %s52, %s68
      %p70 = scmp.eq.s32.totalorder %s32, 0
      %p71 = por %p69, %p70
      %s73 = sadd.s32 %s72, 1
      %p76 = scmp.eq.s32.totalorder %s26, 5
      %p77 = scmp.ne.s32.totalorder %s72, %s74
      %p78 = scmp.eq.s32.totalorder %s26, 0
      %p79 = por %p77, %p78
      %p80 = scmp.ne.s32.totalorder %s72, %s74
      %p81 = scmp.eq.s32.totalorder %s31, 5
      %p82 = por %p80, %p81
      %p83 = scmp.ne.s32.totalorder %s74, %s75
      %p84 = scmp.eq.s32.totalorder %s31, 0
      %p85 = por %p83, %p84
      %p86 = scmp.ne.s32.totalorder %s74, %s75
      %p87 = scmp.eq.s32.totalorder %s32, 5
      %p88 = por %p86, %p87
      %p90 = scmp.ne.s32.totalorder %s75, %s89
      %p91 = scmp.eq.s32.totalorder %s32, 0
      %p92 = por %p90, %p91
      %s94 = sadd.s32 %s93, 1
      %p97 = scmp.eq.s32.totalorder %s26, 5
      %p98 = scmp.ne.s32.totalorder %s93, %s95
      %p99 = scmp.eq.s32.totalorder %s26, 0
      %p100 = por %p98, %p99
      %p101 = scmp.ne.s32.totalorder %s93, %s95
      %p102 = scmp.eq.s32.totalorder %s31, 5
      %p103 = por %p101, %p102
      %p104 = scmp.ne.s32.totalorder %s95, %s96
      %p105 = scmp.eq.s32.totalorder %s31, 0
      %p106 = por %p104, %p105
      %p107 = scmp.ne.s32.totalorder %s95, %s96
      %p108 = scmp.eq.s32.totalorder %s32, 5
      %p109 = por %p107, %p108
      %p111 = scmp.ne.s32.totalorder %s96, %s110
      %p112 = scmp.eq.s32.totalorder %s32, 0
      %p113 = por %p111, %p112
      %s115 = sadd.s32 %s114, 1
      %p118 = scmp.eq.s32.totalorder %s26, 5
      %p119 = scmp.ne.s32.totalorder %s114, %s116
      %p120 = scmp.eq.s32.totalorder %s26, 0
      %p121 = por %p119, %p120
      %p122 = scmp.ne.s32.totalorder %s114, %s116
      %p123 = scmp.eq.s32.totalorder %s31, 5
      %p124 = por %p122, %p123
      %p125 = scmp.ne.s32.totalorder %s116, %s117
      %p126 = scmp.eq.s32.totalorder %s31, 0
      %p127 = por %p125, %p126
      %p128 = scmp.ne.s32.totalorder %s116, %s117
      %p129 = scmp.eq.s32.totalorder %s32, 5
      %p130 = por %p128, %p129
      %p132 = scmp.ne.s32.totalorder %s117, %s131
      %p133 = scmp.eq.s32.totalorder %s32, 0
      %p134 = por %p132, %p133
      %s136 = sadd.s32 %s135, 1
      %p139 = scmp.eq.s32.totalorder %s26, 5
      %p140 = scmp.ne.s32.totalorder %s135, %s137
      %p141 = scmp.eq.s32.totalorder %s26, 0
      %p142 = por %p140, %p141
      %p143 = scmp.ne.s32.totalorder %s135, %s137
      %p144 = scmp.eq.s32.totalorder %s31, 5
      %p145 = por %p143, %p144
      %p146 = scmp.ne.s32.totalorder %s137, %s138
      %p147 = scmp.eq.s32.totalorder %s31, 0
      %p148 = por %p146, %p147
      %p149 = scmp.ne.s32.totalorder %s137, %s138
      %p150 = scmp.eq.s32.totalorder %s32, 5
      %p151 = por %p149, %p150
      %p153 = scmp.ne.s32.totalorder %s138, %s152
      %p154 = scmp.eq.s32.totalorder %s32, 0
      %p155 = por %p153, %p154
      %s157 = sadd.s32 %s156, 1
      %p160 = scmp.eq.s32.totalorder %s26, 5
      %p161 = scmp.ne.s32.totalorder %s156, %s158
      %p162 = scmp.eq.s32.totalorder %s26, 0
      %p163 = por %p161, %p162
      %p164 = scmp.ne.s32.totalorder %s156, %s158
      %p165 = scmp.eq.s32.totalorder %s31, 5
      %p166 = por %p164, %p165
      %p167 = scmp.ne.s32.totalorder %s158, %s159
      %p168 = scmp.eq.s32.totalorder %s31, 0
      %p169 = por %p167, %p168
      %p170 = scmp.ne.s32.totalorder %s158, %s159
      %p171 = scmp.eq.s32.totalorder %s32, 5
      %p172 = por %p170, %p171
      %p174 = scmp.ne.s32.totalorder %s159, %s173
      %p175 = scmp.eq.s32.totalorder %s32, 0
      %p176 = por %p174, %p175
      %s178 = sadd.s32 %s177, 1
      %p181 = scmp.eq.s32.totalorder %s26, 5
      %p182 = scmp.ne.s32.totalorder %s177, %s179
      %p183 = scmp.eq.s32.totalorder %s26, 0
      %p184 = por %p182, %p183
      %p185 = scmp.ne.s32.totalorder %s177, %s179
      %p186 = scmp.eq.s32.totalorder %s31, 5
      %p187 = por %p185, %p186
      %p188 = scmp.ne.s32.totalorder %s179, %s180
      %p189 = scmp.eq.s32.totalorder %s31, 0
      %p190 = por %p188, %p189
      %p191 = scmp.ne.s32.totalorder %s179, %s180
      %p192 = scmp.eq.s32.totalorder %s32, 5
      %p193 = por %p191, %p192
      %p195 = scmp.ne.s32.totalorder %s180, %s194
      %p196 = scmp.eq.s32.totalorder %s32, 0
      %p197 = por %p195, %p196
      %s198 = ssub.s32 %s33, %s45
      %p199 = scmp.eq.s32.totalorder %s198, 0
      %s201 = sadd.s32 %s200, 1
      %s202 = scalar_select %p199, %s200, %s201
      %p205 = pneg %p199
      %p206 = scmp.eq.s32.totalorder %s26, 5
      %p207 = por %p205, %p206
      %p208 = scmp.ne.s32.totalorder %s200, %s203
      %p209 = scmp.eq.s32.totalorder %s26, 0
      %p210 = por %p208, %p209
      %p211 = scmp.ne.s32.totalorder %s200, %s203
      %p212 = scmp.eq.s32.totalorder %s31, 5
      %p213 = por %p211, %p212
      %p214 = scmp.ne.s32.totalorder %s203, %s204
      %p215 = scmp.eq.s32.totalorder %s31, 0
      %p216 = por %p214, %p215
      %p217 = scmp.ne.s32.totalorder %s203, %s204
      %p218 = scmp.eq.s32.totalorder %s32, 5
      %p219 = por %p217, %p218
      %p221 = scmp.ne.s32.totalorder %s204, %s220
      %p222 = scmp.eq.s32.totalorder %s32, 0
      %p223 = por %p221, %p222
      %s224 = ssub.s32 %s33, %s45
      %p225 = scmp.eq.s32.totalorder %s224, 0
      %s227 = sadd.s32 %s226, 1
      %s228 = scalar_select %p225, %s226, %s227
      %p231 = pneg %p225
      %p232 = scmp.eq.s32.totalorder %s26, 5
      %p233 = por %p231, %p232
      %p234 = scmp.ne.s32.totalorder %s226, %s229
      %p235 = scmp.eq.s32.totalorder %s26, 0
      %p236 = por %p234, %p235
      %p237 = scmp.ne.s32.totalorder %s226, %s229
      %p238 = scmp.eq.s32.totalorder %s31, 5
      %p239 = por %p237, %p238
      %p240 = scmp.ne.s32.totalorder %s229, %s230
      %p241 = scmp.eq.s32.totalorder %s31, 0
      %p242 = por %p240, %p241
      %p243 = scmp.ne.s32.totalorder %s229, %s230
      %p244 = scmp.eq.s32.totalorder %s32, 5
      %p245 = por %p243, %p244
      %p247 = scmp.ne.s32.totalorder %s230, %s246
      %p248 = scmp.eq.s32.totalorder %s32, 0
      %p249 = por %p247, %p248
      %p250 = scmp.le.s32.totalorder 1, %s26
      %p251 = scmp.lt.s32.totalorder %s26, 7
      %p252 = pnand %p250, %p251
      %p253 = pneg %p252
      // Predicated region
      $region9: #{tpu_custom_call.1} parent=5 // pred_check
        _
      $region10: #{tpu_custom_call.1} parent=5 // pred_check_branch
        %255 = sbr.rel (%p252) target = $region12
      $region11: #{tpu_custom_call.1} parent=5 // pred_region
        %s256 = ssub.s32 %s26, 1
        // Predicated region
        $region13: #{tpu_custom_call.1} parent=11 // pred_check
          %p257 = pneg %p85
        $region14: #{tpu_custom_call.1} parent=11 // pred_check_branch
          %259 = sbr.rel (%p257) target = $region16
        $region15: #{tpu_custom_call.1} parent=11 // pred_region
          %s261 = ssub.s32 1024, 1024
          %262 = vsyncadd [#allocation9], %s261
          %s263 = sshll.u32 [#allocation8], 4
          %s264 = int_to_ptr.vmem [resolvable:$true] %s263
          %269 = dma.hbm_to_vmem [thread:$0]  %s1, 1024, %s264, [#allocation9], 64, 64, 4
        $region16: #{tpu_custom_call.1} parent=11 // pred_fallthru
          _
        // Predicated region
        $region17: #{tpu_custom_call.1} parent=11 // pred_check
          %p270 = pneg %p106
        $region18: #{tpu_custom_call.1} parent=11 // pred_check_branch
          %272 = sbr.rel (%p270) target = $region20
        $region19: #{tpu_custom_call.1} parent=11 // pred_region
          _
        $region20: #{tpu_custom_call.1} parent=11 // pred_fallthru
          _
        // Predicated region
        $region21: #{tpu_custom_call.1} parent=11 // pred_check
          %p273 = pneg %p127
        $region22: #{tpu_custom_call.1} parent=11 // pred_check_branch
          %275 = sbr.rel (%p273) target = $region24
        $region23: #{tpu_custom_call.1} parent=11 // pred_region
          %s277 = ssub.s32 3072, 3072
          %278 = vsyncadd [#allocation9], %s277
          %s279 = sshll.u32 [#allocation10], 4
          %s280 = int_to_ptr.vmem [resolvable:$true] %s279
          %285 = dma.hbm_to_vmem [thread:$0]  %s3, 3072, %s280, [#allocation9], 64, 64, 4
        $region24: #{tpu_custom_call.1} parent=11 // pred_fallthru
          _
        // Predicated region
        $region25: #{tpu_custom_call.1} parent=11 // pred_check
          %p286 = pneg %p148
        $region26: #{tpu_custom_call.1} parent=11 // pred_check_branch
          %288 = sbr.rel (%p286) target = $region28
        $region27: #{tpu_custom_call.1} parent=11 // pred_region
          _
        $region28: #{tpu_custom_call.1} parent=11 // pred_fallthru
          _
        // Predicated region
        $region29: #{tpu_custom_call.1} parent=11 // pred_check
          %p289 = pneg %p169
        $region30: #{tpu_custom_call.1} parent=11 // pred_check_branch
          %291 = sbr.rel (%p289) target = $region32
        $region31: #{tpu_custom_call.1} parent=11 // pred_region
          %s293 = ssub.s32 1024, 1024
          %294 = vsyncadd [#allocation12], %s293
          %s295 = sshll.u32 [#allocation11], 4
          %s296 = int_to_ptr.vmem [resolvable:$true] %s295
          %301 = dma.hbm_to_vmem [thread:$0]  %s5, 1024, %s296, [#allocation12], 64, 64, 4
        $region32: #{tpu_custom_call.1} parent=11 // pred_fallthru
          _
        // Predicated region
        $region33: #{tpu_custom_call.1} parent=11 // pred_check
          %p302 = pneg %p190
        $region34: #{tpu_custom_call.1} parent=11 // pred_check_branch
          %304 = sbr.rel (%p302) target = $region36
        $region35: #{tpu_custom_call.1} parent=11 // pred_region
          _
        $region36: #{tpu_custom_call.1} parent=11 // pred_fallthru
          _
      $region12: #{tpu_custom_call.1} parent=5 // pred_fallthru
        _
      %p305 = scmp.lt.s32.totalorder %s26, 6
      // Predicated region
      $region37: #{tpu_custom_call.1} parent=5 // pred_check
        %p306 = pneg %p305
      $region38: #{tpu_custom_call.1} parent=5 // pred_check_branch
        %308 = sbr.rel (%p306) target = $region40
      $region39: #{tpu_custom_call.1} parent=5 // pred_region
        // Predicated region
        $region41: #{tpu_custom_call.1} parent=39 // pred_check
          %p309 = pneg %p58
        $region42: #{tpu_custom_call.1} parent=39 // pred_check_branch
          %311 = sbr.rel (%p309) target = $region44
        $region43: #{tpu_custom_call.1} parent=39 // pred_region
          %s312 = sand.u32 %s48, 1
          %s313 = scalar_lea.sflag [#allocation6], %s312
          %s314 = sand.u32 %s48, 1
          %s315 = smul.addr %s314, 8
          %s316 = scalar_lea.vmem [#allocation5], %s315
          %s317 = smul.u32 2, %s33
          %s319 = ssub.s32 128, 128
          %320 = vsyncadd %s313, %s319
          %s321 = smul.addr %s317, 64
          %s322 = scalar_lea.hbm %s0, %s321
          %s323 = sshll.u32 %s316, 4
          %s324 = int_to_ptr.vmem [resolvable:$true] %s323
          %329 = dma.hbm_to_vmem [thread:$0]  %s322, 128, %s324, %s313, 64, 64, 4
        $region44: #{tpu_custom_call.1} parent=39 // pred_fallthru
          _
      $region40: #{tpu_custom_call.1} parent=5 // pred_fallthru
        _
      %p330 = scmp.le.s32.totalorder 1, %s26
      %p331 = scmp.lt.s32.totalorder %s26, 7
      %p332 = pnand %p330, %p331
      %p333 = pneg %p332
      // Predicated region
      $region45: #{tpu_custom_call.1} parent=5 // pred_check
        _
      $region46: #{tpu_custom_call.1} parent=5 // pred_check_branch
        %335 = sbr.rel (%p332) target = $region48
      $region47: #{tpu_custom_call.1} parent=5 // pred_region
        %s336 = ssub.s32 %s26, 1
        %s337 = sand.u32 %s51, 1
        %s338 = scalar_lea.sflag [#allocation6], %s337
        %s339 = sand.u32 %s51, 1
        %s340 = smul.addr %s339, 8
        %s341 = scalar_lea.vmem [#allocation5], %s340
        // Predicated region
        $region49: #{tpu_custom_call.1} parent=47 // pred_check
          %p342 = pneg %p64
        $region50: #{tpu_custom_call.1} parent=47 // pred_check_branch
          %344 = sbr.rel (%p342) target = $region52
        $region51: #{tpu_custom_call.1} parent=47 // pred_region
          %345 = dma.done %s338, 128
        $region52: #{tpu_custom_call.1} parent=47 // pred_fallthru
          _
        // Predicated region
        $region53: #{tpu_custom_call.1} parent=47 // pred_check
          %p346 = pneg %p85
        $region54: #{tpu_custom_call.1} parent=47 // pred_check_branch
          %348 = sbr.rel (%p346) target = $region56
        $region55: #{tpu_custom_call.1} parent=47 // pred_region
          %349 = dma.done [#allocation9], 1024
        $region56: #{tpu_custom_call.1} parent=47 // pred_fallthru
          _
        // Predicated region
        $region57: #{tpu_custom_call.1} parent=47 // pred_check
          %p350 = pneg %p127
        $region58: #{tpu_custom_call.1} parent=47 // pred_check_branch
          %352 = sbr.rel (%p350) target = $region60
        $region59: #{tpu_custom_call.1} parent=47 // pred_region
          %353 = dma.done [#allocation9], 3072
        $region60: #{tpu_custom_call.1} parent=47 // pred_fallthru
          _
        // Predicated region
        $region61: #{tpu_custom_call.1} parent=47 // pred_check
          %p354 = pneg %p169
        $region62: #{tpu_custom_call.1} parent=47 // pred_check_branch
          %356 = sbr.rel (%p354) target = $region64
        $region63: #{tpu_custom_call.1} parent=47 // pred_region
          %357 = dma.done [#allocation12], 1024
        $region64: #{tpu_custom_call.1} parent=47 // pred_fallthru
          _
        %s358 = sand.u32 %s51, 1
        %s359 = scalar_lea.sflag [#allocation6], %s358
        %s360 = sand.u32 %s51, 1
        %s361 = smul.addr %s360, 8
        %s362 = scalar_lea.vmem [#allocation5], %s361
        %p363 = pneg %p64
        %p364 = pneg %p61
        %p365 = pneg %p85
        %p366 = pneg %p82
        %p367 = pneg %p106
        %p368 = pneg %p103
        %p369 = pneg %p127
        %p370 = pneg %p124
        %p371 = pneg %p148
        %p372 = pneg %p145
        %p373 = pneg %p169
        %p374 = pneg %p166
        %p375 = pneg %p190
        %p376 = pneg %p187
        %p377 = pneg %p216
        %p378 = pneg %p213
        %s379 = sand.u32 %s203, 1
        %s380 = scalar_lea.sflag [#allocation7], %s379
        %s381 = sand.u32 %s203, 1
        %s382 = smul.addr %s381, 16
        %s383 = scalar_lea.vmem [#allocation13], %s382
        %p384 = pneg %p242
        %p385 = pneg %p239
        %s386 = sand.u32 %s229, 1
        %s387 = scalar_lea.sflag [#allocation15], %s386
        %s388 = sand.u32 %s229, 1
        %s389 = smul.addr %s388, 16
        %s390 = scalar_lea.vmem [#allocation14], %s389
        %s391 = smul.u32 2, %s35
        %s392 = smul.u32 2, %s35
        %s393 = smul.u32 2, %s35
        %p395 = scmp.eq.s32.totalorder %s36, 0
        // Predicated region
        $region65: #{tpu_custom_call.1} parent=47 // pred_check
          %p396 = pneg %p395
        $region66: #{tpu_custom_call.1} parent=47 // pred_check_branch
          %398 = sbr.rel (%p396) target = $region68
        $region67: #{tpu_custom_call.1} parent=47 // pred_region
          %v399 = vld [vmem:[%s341] sm:$0xf]
          %v400 = vld [vmem:[%s341 + $0x4] sm:$0xf]
          %v401 = vld [vmem:[#allocation8] sm:$0xf]
          %v402 = vld [vmem:[#allocation8 + $0x4] sm:$0xf]
          %v403 = vld [vmem:[#allocation8 + $0x8] sm:$0xf]
          %v404 = vld [vmem:[#allocation8 + $0xc] sm:$0xf]
          %v405 = vld [vmem:[#allocation8 + $0x10] sm:$0xf]
          %v406 = vld [vmem:[#allocation8 + $0x14] sm:$0xf]
          %v407 = vld [vmem:[#allocation8 + $0x18] sm:$0xf]
          %v408 = vld [vmem:[#allocation8 + $0x1c] sm:$0xf]
          %v409 = vld [vmem:[#allocation8 + $0x20] sm:$0xf]
          %v410 = vld [vmem:[#allocation8 + $0x24] sm:$0xf]
          %v411 = vld [vmem:[#allocation8 + $0x28] sm:$0xf]
          %v412 = vld [vmem:[#allocation8 + $0x2c] sm:$0xf]
          %v413 = vld [vmem:[#allocation8 + $0x30] sm:$0xf]
          %v414 = vld [vmem:[#allocation8 + $0x34] sm:$0xf]
          %v415 = vld [vmem:[#allocation8 + $0x38] sm:$0xf]
          %v416 = vld [vmem:[#allocation8 + $0x3c] sm:$0xf]
          %v417 = vld [vmem:[%s2] sm:$0x1]
          %v419 = vlaneseq
          %v420 = vshrl.u32 %v419, 7
          %v421 = vsub.s32 0, %v420
          %v422 = vrot.slane %v417, %v421
          %v426 = vunpack.c.l.b16 %v399
          %v427 = vunpack.c.l.b16 %v400
          %v428 = vpack.c.b16 %v427, %v426
          %v446 = vunpack.c.l.b16 %v401
          %v447 = vunpack.c.l.b16 %v402
          %v448 = vunpack.c.l.b16 %v403
          %v449 = vunpack.c.l.b16 %v404
          %v450 = vunpack.c.l.b16 %v405
          %v451 = vunpack.c.l.b16 %v406
          %v452 = vunpack.c.l.b16 %v407
          %v453 = vunpack.c.l.b16 %v408
          %v454 = vunpack.c.l.b16 %v409
          %v455 = vunpack.c.l.b16 %v410
          %v456 = vunpack.c.l.b16 %v411
          %v457 = vunpack.c.l.b16 %v412
          %v458 = vunpack.c.l.b16 %v413
          %v459 = vunpack.c.l.b16 %v414
          %v460 = vunpack.c.l.b16 %v415
          %v461 = vunpack.c.l.b16 %v416
          %v462 = vpack.c.b16 %v447, %v446
          %v463 = vpack.c.b16 %v449, %v448
          %v464 = vpack.c.b16 %v451, %v450
          %v465 = vpack.c.b16 %v453, %v452
          %v466 = vpack.c.b16 %v455, %v454
          %v467 = vpack.c.b16 %v457, %v456
          %v468 = vpack.c.b16 %v459, %v458
          %v469 = vpack.c.b16 %v461, %v460
          %478 = vmatprep.subr.bf16.mxu0 0
          %479 = vmatpush1.bf16.msra.mxu0 %v469
          %480 = vmatprep.subr.bf16.mxu0 0
          %481 = vmatpush1.bf16.msra.mxu0 %v468
          %482 = vmatprep.subr.bf16.mxu0 0
          %483 = vmatpush1.bf16.msra.mxu0 %v467
          %484 = vmatprep.subr.bf16.mxu0 0
          %485 = vmatpush1.bf16.msra.mxu0 %v466
          %486 = vmatprep.subr.bf16.mxu0 0
          %487 = vmatpush1.bf16.msra.mxu0 %v465
          %488 = vmatprep.subr.bf16.mxu0 0
          %489 = vmatpush1.bf16.msra.mxu0 %v464
          %490 = vmatprep.subr.bf16.mxu0 0
          %491 = vmatpush1.bf16.msra.mxu0 %v463
          %492 = vmatprep.subr.bf16.mxu0 0
          %493 = vmatpush1.bf16.msra.mxu0 %v462
          %494 = vmatprep.subr.bf16.mxu0 0
          %495 = vmatpush2.bf16.msra.mxu0 0
          %496 = vmatprep.subr.bf16.mxu0 0
          %497 = vmatpush2.bf16.msra.mxu0 0
          %498 = vmatprep.subr.bf16.mxu0 0
          %499 = vmatpush2.bf16.msra.mxu0 0
          %500 = vmatprep.subr.bf16.mxu0 0
          %501 = vmatpush2.bf16.msra.mxu0 0
          %502 = vmatprep.subr.bf16.mxu0 0
          %503 = vmatpush2.bf16.msra.mxu0 0
          %504 = vmatprep.subr.bf16.mxu0 0
          %505 = vmatpush2.bf16.msra.mxu0 0
          %506 = vmatprep.subr.bf16.mxu0 0
          %507 = vmatpush2.bf16.msra.mxu0 0
          %508 = vmatprep.subr.bf16.mxu0 0
          %509 = vmatpush2.bf16.msra.mxu0 0
          %510 = vmatprep.mubr.bf16.mxu0 0
          %511 = vmatmul.mubr.bf16.gmra.mxu0 %v428
          %v512 = vpop.f32.mrf.mxu0
          %v513 = vadd.f32 %v422, %v512
          %v514 = vpop.f32.mrf.mxu0
          %v515 = vpop.f32.mrf.mxu0
          %v516 = vadd.f32 %v422, %v515
          %v517 = vpop.f32.mrf.mxu0
          %518 = vdwg.mxu0
          %vm519 = vcmp.gt.f32.partialorder %v513, 0.0
          %vm520 = vcmp.gt.f32.partialorder %v516, 0.0
          %v521 = vmul.f32 %v513, 1.442695
          %v522 = vpow.pop %v521
          %v523 = vmul.f32 %v516, 1.442695
          %v524 = vpow.pop %v523
          %v525 = vsub.f32 %v522, 1.0
          %v526 = vsub.f32 %v524, 1.0
          %v527 = vmul.f32 %v525, 1.6732632
          %v528 = vmul.f32 %v526, 1.6732632
          %v529 = vsel %vm519, %v513, %v527
          %v530 = vsel %vm520, %v516, %v528
          %v531 = vmul.f32 %v529, 1.050701
          %v532 = vmul.f32 %v530, 1.050701
          %533 = vst [vmem:[#allocation2] sm:$0xff] %v531
          %534 = vst [vmem:[#allocation2 + $0x8] sm:$0xff] %v532
          %535 = vst [vmem:[#allocation3] sm:$0xff] 0.0
          %536 = vst [vmem:[#allocation3 + $0x8] sm:$0xff] 0.0
          %537 = vst [vmem:[#allocation4] sm:$0xff] 0.0
          %538 = vst [vmem:[#allocation4 + $0x8] sm:$0xff] 0.0
        $region68: #{tpu_custom_call.1} parent=47 // pred_fallthru
          _
        %s539 = smul.u32 %s36, 16
        %s540 = smul.addr %s539, 4
        %s541 = scalar_lea.vmem [#allocation10], %s540
        %v542 = vld [vmem:[%s541] sm:$0xf]
        %v543 = vld [vmem:[%s541 + $0x4] sm:$0xf]
        %v544 = vld [vmem:[%s541 + $0x8] sm:$0xf]
        %v545 = vld [vmem:[%s541 + $0xc] sm:$0xf]
        %v546 = vld [vmem:[%s541 + $0x10] sm:$0xf]
        %v547 = vld [vmem:[%s541 + $0x14] sm:$0xf]
        %v548 = vld [vmem:[%s541 + $0x18] sm:$0xf]
        %v549 = vld [vmem:[%s541 + $0x1c] sm:$0xf]
        %v550 = vld [vmem:[%s541 + $0x20] sm:$0xf]
        %v551 = vld [vmem:[%s541 + $0x24] sm:$0xf]
        %v552 = vld [vmem:[%s541 + $0x28] sm:$0xf]
        %v553 = vld [vmem:[%s541 + $0x2c] sm:$0xf]
        %v554 = vld [vmem:[%s541 + $0x30] sm:$0xf]
        %v555 = vld [vmem:[%s541 + $0x34] sm:$0xf]
        %v556 = vld [vmem:[%s541 + $0x38] sm:$0xf]
        %v557 = vld [vmem:[%s541 + $0x3c] sm:$0xf]
        %s558 = scalar_lea.vmem %s4, %s36
        %v559 = vld [vmem:[%s558] sm:$0x1]
        %v560 = vld [vmem:[#allocation2] sm:$0xff]
        %v561 = vld [vmem:[#allocation2 + $0x8] sm:$0xff]
        %v562 = vld [vmem:[#allocation3] sm:$0xff]
        %v563 = vld [vmem:[#allocation3 + $0x8] sm:$0xff]
        %v564 = vadd.f32 %v560, %v562
        %v565 = vadd.f32 %v561, %v563
        %v566 = vpack.c.bf16 %v565, %v564
        %v568 = vlaneseq
        %v569 = vshrl.u32 %v568, 7
        %v570 = vsub.s32 0, %v569
        %v571 = vrot.slane %v559, %v570
        %v589 = vunpack.c.l.b16 %v542
        %v590 = vunpack.c.l.b16 %v543
        %v591 = vunpack.c.l.b16 %v544
        %v592 = vunpack.c.l.b16 %v545
        %v593 = vunpack.c.l.b16 %v546
        %v594 = vunpack.c.l.b16 %v547
        %v595 = vunpack.c.l.b16 %v548
        %v596 = vunpack.c.l.b16 %v549
        %v597 = vunpack.c.l.b16 %v550
        %v598 = vunpack.c.l.b16 %v551
        %v599 = vunpack.c.l.b16 %v552
        %v600 = vunpack.c.l.b16 %v553
        %v601 = vunpack.c.l.b16 %v554
        %v602 = vunpack.c.l.b16 %v555
        %v603 = vunpack.c.l.b16 %v556
        %v604 = vunpack.c.l.b16 %v557
        %v605 = vpack.c.b16 %v590, %v589
        %v606 = vpack.c.b16 %v592, %v591
        %v607 = vpack.c.b16 %v594, %v593
        %v608 = vpack.c.b16 %v596, %v595
        %v609 = vpack.c.b16 %v598, %v597
        %v610 = vpack.c.b16 %v600, %v599
        %v611 = vpack.c.b16 %v602, %v601
        %v612 = vpack.c.b16 %v604, %v603
        %621 = vmatprep.subr.bf16.mxu0 0
        %622 = vmatpush1.bf16.msra.mxu0 %v612
        %623 = vmatprep.subr.bf16.mxu0 0
        %624 = vmatpush1.bf16.msra.mxu0 %v611
        %625 = vmatprep.subr.bf16.mxu0 0
        %626 = vmatpush1.bf16.msra.mxu0 %v610
        %627 = vmatprep.subr.bf16.mxu0 0
        %628 = vmatpush1.bf16.msra.mxu0 %v609
        %629 = vmatprep.subr.bf16.mxu0 0
        %630 = vmatpush1.bf16.msra.mxu0 %v608
        %631 = vmatprep.subr.bf16.mxu0 0
        %632 = vmatpush1.bf16.msra.mxu0 %v607
        %633 = vmatprep.subr.bf16.mxu0 0
        %634 = vmatpush1.bf16.msra.mxu0 %v606
        %635 = vmatprep.subr.bf16.mxu0 0
        %636 = vmatpush1.bf16.msra.mxu0 %v605
        %637 = vmatprep.subr.bf16.mxu0 0
        %638 = vmatpush2.bf16.msra.mxu0 0
        %639 = vmatprep.subr.bf16.mxu0 0
        %640 = vmatpush2.bf16.msra.mxu0 0
        %641 = vmatprep.subr.bf16.mxu0 0
        %642 = vmatpush2.bf16.msra.mxu0 0
        %643 = vmatprep.subr.bf16.mxu0 0
        %644 = vmatpush2.bf16.msra.mxu0 0
        %645 = vmatprep.subr.bf16.mxu0 0
        %646 = vmatpush2.bf16.msra.mxu0 0
        %647 = vmatprep.subr.bf16.mxu0 0
        %648 = vmatpush2.bf16.msra.mxu0 0
        %649 = vmatprep.subr.bf16.mxu0 0
        %650 = vmatpush2.bf16.msra.mxu0 0
        %651 = vmatprep.subr.bf16.mxu0 0
        %652 = vmatpush2.bf16.msra.mxu0 0
        %653 = vmatprep.mubr.bf16.mxu0 0
        %654 = vmatmul.mubr.bf16.gmra.mxu0 %v566
        %v655 = vpop.f32.mrf.mxu0
        %v656 = vadd.f32 %v571, %v655
        %v657 = vpop.f32.mrf.mxu0
        %v658 = vpop.f32.mrf.mxu0
        %v659 = vadd.f32 %v571, %v658
        %v660 = vpop.f32.mrf.mxu0
        %661 = vdwg.mxu0
        %vm662 = vcmp.gt.f32.partialorder %v656, 0.0
        %vm663 = vcmp.gt.f32.partialorder %v659, 0.0
        %v664 = vmul.f32 %v656, 1.442695
        %v665 = vpow.pop %v664
        %v666 = vmul.f32 %v659, 1.442695
        %v667 = vpow.pop %v666
        %v668 = vsub.f32 %v665, 1.0
        %v669 = vsub.f32 %v667, 1.0
        %v670 = vmul.f32 %v668, 1.6732632
        %v671 = vmul.f32 %v669, 1.6732632
        %v672 = vsel %vm662, %v656, %v670
        %v673 = vsel %vm663, %v659, %v671
        %v674 = vmul.f32 %v672, 1.050701
        %v675 = vmul.f32 %v673, 1.050701
        %v676 = vmul.f32 %v562, 0.8
        %v677 = vmul.f32 %v563, 0.8
        %v678 = vmul.f32 %v674, 0.2
        %v679 = vmul.f32 %v675, 0.2
        %v680 = vadd.f32 %v676, %v678
        %v681 = vadd.f32 %v677, %v679
        %v682 = vld [vmem:[#allocation4] sm:$0xff]
        %v683 = vld [vmem:[#allocation4 + $0x8] sm:$0xff]
        %v684 = vadd.f32 %v682, %v674
        %v685 = vadd.f32 %v683, %v675
        %v686 = vmul.f32 %v684, 0.33333334
        %v687 = vmul.f32 %v685, 0.33333334
        %v688 = vtanh.pop %v686
        %v689 = vtanh.pop %v687
        %690 = vst [vmem:[#allocation2] sm:$0xff] %v688
        %691 = vst [vmem:[#allocation2 + $0x8] sm:$0xff] %v689
        %692 = vst [vmem:[#allocation3] sm:$0xff] %v680
        %693 = vst [vmem:[#allocation3 + $0x8] sm:$0xff] %v681
        %694 = vst [vmem:[#allocation4] sm:$0xff] %v684
        %695 = vst [vmem:[#allocation4 + $0x8] sm:$0xff] %v685
        %p696 = scmp.eq.s32.totalorder %s36, 2
        // Predicated region
        $region69: #{tpu_custom_call.1} parent=47 // pred_check
          %p697 = pneg %p696
        $region70: #{tpu_custom_call.1} parent=47 // pred_check_branch
          %699 = sbr.rel (%p697) target = $region72
        $region71: #{tpu_custom_call.1} parent=47 // pred_region
          %700 = vst [vmem:[%s390] sm:$0xff] %v688
          %701 = vst [vmem:[%s390 + $0x8] sm:$0xff] %v689
          %v702 = vpack.c.bf16 %v689, %v688
          %v703 = vld [vmem:[#allocation11] sm:$0xf]
          %v704 = vld [vmem:[#allocation11 + $0x4] sm:$0xf]
          %v705 = vld [vmem:[#allocation11 + $0x8] sm:$0xf]
          %v706 = vld [vmem:[#allocation11 + $0xc] sm:$0xf]
          %v707 = vld [vmem:[#allocation11 + $0x10] sm:$0xf]
          %v708 = vld [vmem:[#allocation11 + $0x14] sm:$0xf]
          %v709 = vld [vmem:[#allocation11 + $0x18] sm:$0xf]
          %v710 = vld [vmem:[#allocation11 + $0x1c] sm:$0xf]
          %v711 = vld [vmem:[#allocation11 + $0x20] sm:$0xf]
          %v712 = vld [vmem:[#allocation11 + $0x24] sm:$0xf]
          %v713 = vld [vmem:[#allocation11 + $0x28] sm:$0xf]
          %v714 = vld [vmem:[#allocation11 + $0x2c] sm:$0xf]
          %v715 = vld [vmem:[#allocation11 + $0x30] sm:$0xf]
          %v716 = vld [vmem:[#allocation11 + $0x34] sm:$0xf]
          %v717 = vld [vmem:[#allocation11 + $0x38] sm:$0xf]
          %v718 = vld [vmem:[#allocation11 + $0x3c] sm:$0xf]
          %v719 = vld [vmem:[%s6] sm:$0x1]
          %v721 = vlaneseq
          %v722 = vshrl.u32 %v721, 7
          %v723 = vsub.s32 0, %v722
          %v724 = vrot.slane %v719, %v723
          %v742 = vunpack.c.l.b16 %v703
          %v743 = vunpack.c.l.b16 %v704
          %v744 = vunpack.c.l.b16 %v705
          %v745 = vunpack.c.l.b16 %v706
          %v746 = vunpack.c.l.b16 %v707
          %v747 = vunpack.c.l.b16 %v708
          %v748 = vunpack.c.l.b16 %v709
          %v749 = vunpack.c.l.b16 %v710
          %v750 = vunpack.c.l.b16 %v711
          %v751 = vunpack.c.l.b16 %v712
          %v752 = vunpack.c.l.b16 %v713
          %v753 = vunpack.c.l.b16 %v714
          %v754 = vunpack.c.l.b16 %v715
          %v755 = vunpack.c.l.b16 %v716
          %v756 = vunpack.c.l.b16 %v717
          %v757 = vunpack.c.l.b16 %v718
          %v758 = vpack.c.b16 %v743, %v742
          %v759 = vpack.c.b16 %v745, %v744
          %v760 = vpack.c.b16 %v747, %v746
          %v761 = vpack.c.b16 %v749, %v748
          %v762 = vpack.c.b16 %v751, %v750
          %v763 = vpack.c.b16 %v753, %v752
          %v764 = vpack.c.b16 %v755, %v754
          %v765 = vpack.c.b16 %v757, %v756
          %774 = vmatprep.subr.bf16.mxu0 0
          %775 = vmatpush1.bf16.msra.mxu0 %v765
          %776 = vmatprep.subr.bf16.mxu0 0
          %777 = vmatpush1.bf16.msra.mxu0 %v764
          %778 = vmatprep.subr.bf16.mxu0 0
          %779 = vmatpush1.bf16.msra.mxu0 %v763
          %780 = vmatprep.subr.bf16.mxu0 0
          %781 = vmatpush1.bf16.msra.mxu0 %v762
          %782 = vmatprep.subr.bf16.mxu0 0
          %783 = vmatpush1.bf16.msra.mxu0 %v761
          %784 = vmatprep.subr.bf16.mxu0 0
          %785 = vmatpush1.bf16.msra.mxu0 %v760
          %786 = vmatprep.subr.bf16.mxu0 0
          %787 = vmatpush1.bf16.msra.mxu0 %v759
          %788 = vmatprep.subr.bf16.mxu0 0
          %789 = vmatpush1.bf16.msra.mxu0 %v758
          %790 = vmatprep.subr.bf16.mxu0 0
          %791 = vmatpush2.bf16.msra.mxu0 0
          %792 = vmatprep.subr.bf16.mxu0 0
          %793 = vmatpush2.bf16.msra.mxu0 0
          %794 = vmatprep.subr.bf16.mxu0 0
          %795 = vmatpush2.bf16.msra.mxu0 0
          %796 = vmatprep.subr.bf16.mxu0 0
          %797 = vmatpush2.bf16.msra.mxu0 0
          %798 = vmatprep.subr.bf16.mxu0 0
          %799 = vmatpush2.bf16.msra.mxu0 0
          %800 = vmatprep.subr.bf16.mxu0 0
          %801 = vmatpush2.bf16.msra.mxu0 0
          %802 = vmatprep.subr.bf16.mxu0 0
          %803 = vmatpush2.bf16.msra.mxu0 0
          %804 = vmatprep.subr.bf16.mxu0 0
          %805 = vmatpush2.bf16.msra.mxu0 0
          %806 = vmatprep.mubr.bf16.mxu0 0
          %807 = vmatmul.mubr.bf16.gmra.mxu0 %v702
          %v808 = vpop.f32.mrf.mxu0
          %v809 = vadd.f32 %v724, %v808
          %v810 = vpop.f32.mrf.mxu0
          %v811 = vpop.f32.mrf.mxu0
          %v812 = vadd.f32 %v724, %v811
          %v813 = vpop.f32.mrf.mxu0
          %814 = vdwg.mxu0
          %815 = vst [vmem:[%s383] sm:$0xff] %v809
          %816 = vst [vmem:[%s383 + $0x8] sm:$0xff] %v812
        $region72: #{tpu_custom_call.1} parent=47 // pred_fallthru
          _
        %s817 = sand.u32 %s203, 1
        %s818 = scalar_lea.sflag [#allocation7], %s817
        %s819 = sand.u32 %s203, 1
        %s820 = smul.addr %s819, 16
        %s821 = scalar_lea.vmem [#allocation13], %s820
        %s822 = sand.u32 %s229, 1
        %s823 = scalar_lea.sflag [#allocation15], %s822
        %s824 = sand.u32 %s229, 1
        %s825 = smul.addr %s824, 16
        %s826 = scalar_lea.vmem [#allocation14], %s825
        // Predicated region
        $region73: #{tpu_custom_call.1} parent=47 // pred_check
          %p827 = pneg %p213
        $region74: #{tpu_custom_call.1} parent=47 // pred_check_branch
          %829 = sbr.rel (%p827) target = $region76
        $region75: #{tpu_custom_call.1} parent=47 // pred_region
          %s830 = smul.u32 2, %s35
          %s832 = ssub.s32 256, 256
          %833 = vsyncadd %s818, %s832
          %s834 = smul.addr %s830, 128
          %s835 = scalar_lea.hbm %s7, %s834
          %s836 = sshll.u32 %s821, 4
          %s837 = int_to_ptr.vmem [resolvable:$true] %s836
          %842 = dma.vmem_to_hbm [thread:$0]  %s837, 256, %s835, %s818, 128, 128, 8
        $region76: #{tpu_custom_call.1} parent=47 // pred_fallthru
          _
        // Predicated region
        $region77: #{tpu_custom_call.1} parent=47 // pred_check
          %p843 = pneg %p239
        $region78: #{tpu_custom_call.1} parent=47 // pred_check_branch
          %845 = sbr.rel (%p843) target = $region80
        $region79: #{tpu_custom_call.1} parent=47 // pred_region
          %s846 = smul.u32 2, %s35
          %s848 = ssub.s32 256, 256
          %849 = vsyncadd %s823, %s848
          %s850 = smul.addr %s846, 128
          %s851 = scalar_lea.hbm %s8, %s850
          %s852 = sshll.u32 %s826, 4
          %s853 = int_to_ptr.vmem [resolvable:$true] %s852
          %858 = dma.vmem_to_hbm [thread:$0]  %s853, 256, %s851, %s823, 128, 128, 8
        $region80: #{tpu_custom_call.1} parent=47 // pred_fallthru
          _
      $region48: #{tpu_custom_call.1} parent=5 // pred_fallthru
        _
      %p859 = scmp.le.s32.totalorder 2, %s26
      // Predicated region
      $region81: #{tpu_custom_call.1} parent=5 // pred_check
        %p860 = pneg %p859
      $region82: #{tpu_custom_call.1} parent=5 // pred_check_branch
        %862 = sbr.rel (%p860) target = $region84
      $region83: #{tpu_custom_call.1} parent=5 // pred_region
        %s863 = ssub.s32 %s26, 2
        // Predicated region
        $region85: #{tpu_custom_call.1} parent=83 // pred_check
          %p864 = pneg %p219
        $region86: #{tpu_custom_call.1} parent=83 // pred_check_branch
          %866 = sbr.rel (%p864) target = $region88
        $region87: #{tpu_custom_call.1} parent=83 // pred_region
          %s867 = sand.u32 %s204, 1
          %s868 = scalar_lea.sflag [#allocation7], %s867
          %s869 = sand.u32 %s204, 1
          %s870 = smul.addr %s869, 16
          %s871 = scalar_lea.vmem [#allocation13], %s870
          %872 = dma.done %s868, 256
        $region88: #{tpu_custom_call.1} parent=83 // pred_fallthru
          _
        // Predicated region
        $region89: #{tpu_custom_call.1} parent=83 // pred_check
          %p873 = pneg %p245
        $region90: #{tpu_custom_call.1} parent=83 // pred_check_branch
          %875 = sbr.rel (%p873) target = $region92
        $region91: #{tpu_custom_call.1} parent=83 // pred_region
          %s876 = sand.u32 %s230, 1
          %s877 = scalar_lea.sflag [#allocation15], %s876
          %s878 = sand.u32 %s230, 1
          %s879 = smul.addr %s878, 16
          %s880 = scalar_lea.vmem [#allocation14], %s879
          %881 = dma.done %s877, 256
        $region92: #{tpu_custom_call.1} parent=83 // pred_fallthru
          _
      $region84: #{tpu_custom_call.1} parent=5 // pred_fallthru
        _
    $region6: #{tpu_custom_call.1} parent=1 // loop_footer
      %s30 = sadd.s32 1, %s26
    $region7: #{tpu_custom_call.1} parent=1 // loop_footer_branch
      %25 = sbr.rel target = $region3
    $region8: #{tpu_custom_call.1} parent=1 // loop_exit
      _
    %882 = vsyncpa [#allocation6], 1
    %s883 = scalar_lea.sflag [#allocation6], 1
    %884 = vsyncpa %s883, 1
    %885 = vsyncpa [#allocation9], 1
    %886 = vsyncpa [#allocation12], 1
    %887 = vsyncpa [#allocation7], 1
    %s888 = scalar_lea.sflag [#allocation7], 1
    %889 = vsyncpa %s888, 1
    %890 = vsyncpa [#allocation15], 1
    %s891 = scalar_lea.sflag [#allocation15], 1
    %892 = vsyncpa %s891, 1

</llo_original>
